<compile_context>
chip_gen: v5e
topology: v5e:2x2
jax: 0.10.0
libtpu: 0.0.40
codegen_flags: <defaults>
</compile_context>

<pallas_src>
import jax
import jax.numpy as jnp
from jax import lax
from jax.experimental import pallas as pl
from jax.experimental.pallas import tpu as pltpu

# ---------------- small synthetic config ----------------
VOCAB_SIZE  = 100
EMBED_SIZE  = 32            # d_model == BERT hidden size (synthetic, real cfg = 768)
HIDDEN_SIZE = 32            # BiLSTM output size (== EMBED_SIZE so residual add works)
HD          = HIDDEN_SIZE // 2   # per-direction LSTM hidden (16)
NUM_HEAD    = 4
HEAD_DIM    = EMBED_SIZE // NUM_HEAD
NUM_T_LAYER = 1             # kernel implements one TransformerEncoderLayer
FFN_DIM     = 128           # nn.TransformerEncoderLayer default is 2048; scaled down
NUM_TAGS    = 8
TAG_PAD_IDX = 0
LN_EPS      = 1e-5
TAG_PAD_DIM = 128           # lane-dense padded tag dim for the prob output
MASK_BIAS   = -1e32         # matches PyTorch `* -1e+32`
NEG_INF     = -3.0e38       # finite "minus infinity" (avoids 0*inf -> NaN in the loss)

# rows of the packed bias / LayerNorm vector input (each row is 128 lanes)
VR_BQ, VR_BK, VR_BV, VR_BO = 0, 1, 2, 3
VR_G1, VR_BE1, VR_B1, VR_B2, VR_G2, VR_BE2 = 4, 5, 6, 7, 8, 9
VR_BIH, VR_BT = 10, 11
N_VEC = 12

_VMEM = pl.BlockSpec(memory_space=pltpu.MemorySpace.VMEM)


# ---------------- fused Pallas kernel ----------------
def _layer_norm(x, gamma, beta):
    mean = jnp.mean(x, axis=-1, keepdims=True)
    var = jnp.mean((x - mean) ** 2, axis=-1, keepdims=True)
    return (x - mean) * lax.rsqrt(var + LN_EPS) * gamma + beta


def slu_fused_kernel(
    x_ref,                      # (BS, E)   bert_out, flattened in the wrapper
    wq_ref, wk_ref, wv_ref,     # (E, E) lane-dense projections
    wo_ref,                     # (E, E) output projection
    w1_ref, w2_ref,             # (E, F), (F, E) FFN
    wih_ref, whh_ref,           # (E, 8HD), (2HD, 8HD) fused BiLSTM
    wt_ref,                     # (2HD, TAG_PAD_DIM) decoder (tag dim zero-padded)
    vec_ref,                    # (N_VEC, 128) packed bias / LayerNorm vectors
    mcat_ref,                   # (S, B, 2HD) direction-aware length mask
    tag_mask_ref,               # (BS, 1) f32
    tag_ids_ref,                # (BS, 1) i32
    prob_ref,                   # out (BS, TAG_PAD_DIM)
    loss_ref,                   # out (1, 1)
):
    S, B, _ = mcat_ref.shape
    BS, E = x_ref.shape
    scale = 1.0 / (HEAD_DIM ** 0.5)

    # unpack the tiny vectors (static sublane/lane slices; one DMA for all of them)
    bq  = vec_ref[VR_BQ:VR_BQ + 1, 0:E]
    bk  = vec_ref[VR_BK:VR_BK + 1, 0:E]
    bv  = vec_ref[VR_BV:VR_BV + 1, 0:E]
    bo  = vec_ref[VR_BO:VR_BO + 1, 0:E]
    g1  = vec_ref[VR_G1:VR_G1 + 1, 0:E]
    be1 = vec_ref[VR_BE1:VR_BE1 + 1, 0:E]
    b1  = vec_ref[VR_B1:VR_B1 + 1, 0:FFN_DIM]
    b2  = vec_ref[VR_B2:VR_B2 + 1, 0:E]
    g2  = vec_ref[VR_G2:VR_G2 + 1, 0:E]
    be2 = vec_ref[VR_BE2:VR_BE2 + 1, 0:E]
    bih = vec_ref[VR_BIH:VR_BIH + 1, 0:8 * HD]
    bt  = vec_ref[VR_BT:VR_BT + 1, 0:TAG_PAD_DIM]

    x2d = x_ref[...]                                        # (BS, E)

    # ---- nn.TransformerEncoderLayer (post-norm, ReLU), dropout = identity ----
    # Lane-dense projections: three (BS,E)@(E,E) dots instead of 12 per-head dots.
    q2d = jnp.dot(x2d, wq_ref[...], preferred_element_type=jnp.float32) + bq
    k2d = jnp.dot(x2d, wk_ref[...], preferred_element_type=jnp.float32) + bk
    v2d = jnp.dot(x2d, wv_ref[...], preferred_element_type=jnp.float32) + bv
    q3 = q2d.reshape(B, S, E)
    k3 = k2d.reshape(B, S, E)
    v3 = v2d.reshape(B, S, E)

    ctx_heads = []
    for h in range(NUM_HEAD):                               # only the tiny score /
        lo, hi = h * HEAD_DIM, (h + 1) * HEAD_DIM           # context einsums per head
        qh, kh, vh = q3[:, :, lo:hi], k3[:, :, lo:hi], v3[:, :, lo:hi]
        att = jnp.einsum('bqd,bkd->bqk', qh, kh,
                         preferred_element_type=jnp.float32) * scale
        am = jnp.max(att, axis=-1, keepdims=True)
        ea = jnp.exp(att - am)
        pa = ea * pl.reciprocal(jnp.sum(ea, axis=-1, keepdims=True), approx=True)
        ctx_heads.append(jnp.einsum('bqk,bkd->bqd', pa, vh,
                                    preferred_element_type=jnp.float32))
    ctx2d = jnp.concatenate(ctx_heads, axis=-1).reshape(BS, E)
    # one K=E output-projection dot (instead of 4 accumulated K=HEAD_DIM dots)
    sa2d = jnp.dot(ctx2d, wo_ref[...], preferred_element_type=jnp.float32) + bo

    x1 = _layer_norm(x2d + sa2d, g1, be1)
    ff = jnp.maximum(
        jnp.dot(x1, w1_ref[...], preferred_element_type=jnp.float32) + b1, 0.0)
    ff = jnp.dot(ff, w2_ref[...], preferred_element_type=jnp.float32) + b2
    enc = _layer_norm(x1 + ff, g2, be2)

    # transformer_out = transformer_encoder(bert_out) + bert_out
    t_out2d = enc + x2d

    # ---- fused bidirectional LSTM (pack/pad emulated with length masks) ----
    # Gate lanes: [i_f|i_r|f_f|f_r|o_f|o_r|g_f|g_r] (each HD wide).
    gx2d = (jnp.dot(t_out2d, wih_ref[...], preferred_element_type=jnp.float32) + bih)
    gx3 = gx2d.reshape(B, S, 8 * HD)

    col = lax.broadcasted_iota(jnp.int32, (1, 8 * HD), 1)
    is_fwd = (col & (2 * HD - 1)) < HD                      # forward-gate columns
    # hoisted out of the recurrence: merged fwd/bwd gate inputs per step
    gx_steps = [jnp.where(is_fwd, gx3[:, t, :], gx3[:, S - 1 - t, :])
                for t in range(S)]

    mcat = mcat_ref[...]                                    # (S, B, 2HD)
    whh = whh_ref[...]

    h_c = jnp.zeros((B, 2 * HD), jnp.float32)               # [h_fwd | h_bwd]
    c_c = jnp.zeros((B, 2 * HD), jnp.float32)               # [c_fwd | c_bwd]
    hf_t = [None] * S                                       # outputs stay in registers
    hr_t = [None] * S
    for step in range(S):                                   # fully unrolled, S=8
        gates = gx_steps[step] + jnp.dot(h_c, whh,
                                         preferred_element_type=jnp.float32)
        sig = jax.nn.sigmoid(gates[:, :6 * HD])             # i,f,o for both dirs
        i_c = sig[:, 0:2 * HD]
        f_c = sig[:, 2 * HD:4 * HD]
        o_c = sig[:, 4 * HD:6 * HD]
        g_c = jnp.tanh(gates[:, 6 * HD:])
        c_new = f_c * c_c + i_c * g_c
        h_new = o_c * jnp.tanh(c_new)
        m_step = mcat[step]                                 # (B, 2HD)
        hf_t[step] = h_new[:, 0:HD] * m_step[:, 0:HD]
        hr_t[S - 1 - step] = h_new[:, HD:2 * HD] * m_step[:, HD:2 * HD]
        h_c = jnp.where(m_step > 0, h_new, h_c)
        c_c = jnp.where(m_step > 0, c_new, c_c)

    rnn2d = jnp.concatenate(
        [jnp.stack(hf_t, axis=1), jnp.stack(hr_t, axis=1)], axis=-1
    ).reshape(BS, 2 * HD)                                   # (BS, 2HD)

    # out = rnn_out + transformer_out ; dropout = identity
    hid2d = rnn2d + t_out2d

    # ---- TaggingFNNDecoder (tag dim padded to TAG_PAD_DIM, lane-dense store) ----
    logits = (jnp.dot(hid2d, wt_ref[...], preferred_element_type=jnp.float32) + bt)
    mask2d = tag_mask_ref[...]                              # (BS, 1)
    logits = logits + (1.0 - mask2d) * MASK_BIAS            # PyTorch length masking
    lane = lax.broadcasted_iota(jnp.int32, (BS, TAG_PAD_DIM), 1)
    logits = jnp.where(lane < NUM_TAGS, logits, NEG_INF)    # exclude padded tag lanes

    lm = jnp.max(logits, axis=-1, keepdims=True)
    le = jnp.exp(logits - lm)
    denom = jnp.sum(le, axis=-1, keepdims=True)
    prob_ref[...] = le / denom                              # exact normalization

    logp = (logits - lm) - jnp.log(denom)                   # log-softmax
    labels = tag_ids_ref[...]                               # (BS, 1) int32
    onehot = (lane == labels).astype(jnp.float32)
    nll = -jnp.sum(onehot * logp, axis=-1, keepdims=True)   # (BS, 1)
    valid = (labels != TAG_PAD_IDX).astype(jnp.float32)     # ignore_index == pad
    num = jnp.sum(nll * valid, axis=0, keepdims=True)       # (1, 1)
    den = jnp.maximum(jnp.sum(valid, axis=0, keepdims=True), 1.0)
    loss_ref[...] = num / den


# ---------------- wrapper-side parameter refactoring (pure JAX, free) ----------------
def _gate_blocks_ifog(w):
    """PyTorch LSTM gate order along dim 0 is (i, f, g, o); return [i, f, o, g]."""
    i = w[0 * HD:1 * HD]
    f = w[1 * HD:2 * HD]
    g = w[2 * HD:3 * HD]
    o = w[3 * HD:4 * HD]
    return [i, f, o, g]


def _fuse_lstm_params(p):
    """Fused BiLSTM weights with lanes [i_f|i_r|f_f|f_r|o_f|o_r|g_f|g_r]."""
    bf = _gate_blocks_ifog(p['wih_f'])                       # each (HD, E)
    bb = _gate_blocks_ifog(p['wih_b'])
    wih = jnp.concatenate([blk for k in range(4) for blk in (bf[k], bb[k])],
                          axis=0).T                          # (E, 8*HD)

    vbf = _gate_blocks_ifog((p['bih_f'] + p['bhh_f'])[:, None])
    vbb = _gate_blocks_ifog((p['bih_b'] + p['bhh_b'])[:, None])
    bih = jnp.concatenate([blk for k in range(4) for blk in (vbf[k], vbb[k])],
                          axis=0).T                          # (1, 8*HD)

    hf = _gate_blocks_ifog(p['whh_f'])                       # each (HD, HD)
    hb = _gate_blocks_ifog(p['whh_b'])
    z = jnp.zeros((HD, HD), jnp.float32)
    cols = []
    for k in range(4):
        cols.append(jnp.concatenate([hf[k].T, z], axis=0))   # fwd column block
        cols.append(jnp.concatenate([z, hb[k].T], axis=0))   # bwd column block
    whh = jnp.concatenate(cols, axis=1)                      # (2*HD, 8*HD) block-diag
    return wih, bih, whh


def _pack_row(v):
    v = v.reshape(-1).astype(jnp.float32)
    return jnp.zeros((1, 128), jnp.float32).at[0, :v.shape[0]].set(v)


def slu_tagging_forward(params, input_ids, tag_ids, tag_mask, lengths):
    # TODO(synk): stand-in for BertTokenizer + pretrained BertModel last_hidden_state.
    bert_out = jnp.take(params['embed'], input_ids, axis=0).astype(jnp.float32)
    B, S, E = bert_out.shape
    BS = B * S

    tp = params['tlayer']
    wqkv, bqkv = tp['wqkv'], tp['bqkv']
    wq, wk, wv = wqkv[:E].T, wqkv[E:2 * E].T, wqkv[2 * E:].T          # (E, E) each
    bq, bk, bv = bqkv[:E], bqkv[E:2 * E], bqkv[2 * E:]
    wo = tp['wo'].T

    wih, bih, whh = _fuse_lstm_params(params['lstm'])

    wt = jnp.zeros((HIDDEN_SIZE, TAG_PAD_DIM), jnp.float32)
    wt = wt.at[:, :NUM_TAGS].set(params['dec']['w_out'].T)
    bt = jnp.zeros((TAG_PAD_DIM,), jnp.float32).at[:NUM_TAGS].set(params['dec']['b_out'])

    # one packed (N_VEC, 128) array for all tiny bias / LayerNorm vectors
    vecs = jnp.concatenate([
        _pack_row(bq), _pack_row(bk), _pack_row(bv), _pack_row(tp['bo']),
        _pack_row(tp['g1']), _pack_row(tp['be1']), _pack_row(tp['b1']),
        _pack_row(tp['b2']), _pack_row(tp['g2']), _pack_row(tp['be2']),
        _pack_row(bih), _pack_row(bt)], axis=0)              # (12, 128)

    # direction-aware length mask: first HD lanes = valid(t), last HD = valid(S-1-t)
    valid = (jnp.arange(S)[None, :] < lengths[:, None]).astype(jnp.float32)  # (B,S)
    valid_rev = valid[:, ::-1]
    mcat = jnp.concatenate(
        [jnp.broadcast_to(valid[..., None], (B, S, HD)),
         jnp.broadcast_to(valid_rev[..., None], (B, S, HD))], axis=-1)
    mcat = jnp.transpose(mcat, (1, 0, 2))                    # (S, B, 2HD)

    args = (bert_out.reshape(BS, E),
            wq, wk, wv, wo,
            tp['w1'].T, tp['w2'].T,
            wih, whh, wt,
            vecs, mcat,
            tag_mask.astype(jnp.float32).reshape(BS, 1),
            tag_ids.astype(jnp.int32).reshape(BS, 1))

    prob_pad, loss = pl.pallas_call(
        slu_fused_kernel,
        out_shape=(jax.ShapeDtypeStruct((BS, TAG_PAD_DIM), jnp.float32),
                   jax.ShapeDtypeStruct((1, 1), jnp.float32)),
        in_specs=[_VMEM] * len(args),
        out_specs=(_VMEM, _VMEM),
    )(*args)

    prob = prob_pad[:, :NUM_TAGS].reshape(B, S, NUM_TAGS)
    return prob, loss[0, 0]


# ---------------- deterministic parameter init ----------------
def init_params(key):
    ks = iter(jax.random.split(key, 32))
    r = lambda *shape: 0.05 * jax.random.normal(next(ks), shape, jnp.float32)
    E, F, T = EMBED_SIZE, FFN_DIM, NUM_TAGS
    params = {
        'embed': r(VOCAB_SIZE, E),
        'tlayer': {
            'wqkv': r(3 * E, E), 'bqkv': r(3 * E),
            'wo': r(E, E), 'bo': r(E),
            'g1': jnp.ones((E,), jnp.float32), 'be1': jnp.zeros((E,), jnp.float32),
            'w1': r(F, E), 'b1': r(F),
            'w2': r(E, F), 'b2': r(E),
            'g2': jnp.ones((E,), jnp.float32), 'be2': jnp.zeros((E,), jnp.float32),
        },
        'lstm': {
            'wih_f': r(4 * HD, E), 'whh_f': r(4 * HD, HD),
            'bih_f': r(4 * HD), 'bhh_f': r(4 * HD),
            'wih_b': r(4 * HD, E), 'whh_b': r(4 * HD, HD),
            'bih_b': r(4 * HD), 'bhh_b': r(4 * HD),
        },
        'dec': {'w_out': r(T, HIDDEN_SIZE), 'b_out': r(T)},
    }
    return params


if __name__ == "__main__":
    key = jax.random.PRNGKey(0)
    kp, k1, k2 = jax.random.split(key, 3)
    params = init_params(kp)

    B, S = 2, 8
    lengths = jnp.array([8, 5], dtype=jnp.int32)          # sorted desc (enforce_sorted)
    input_ids = jax.random.randint(k1, (B, S), 1, VOCAB_SIZE, dtype=jnp.int32)
    tag_mask = (jnp.arange(S)[None, :] < lengths[:, None]).astype(jnp.float32)
    tag_ids = jax.random.randint(k2, (B, S), 1, NUM_TAGS, dtype=jnp.int32)
    tag_ids = jnp.where(tag_mask > 0, tag_ids, TAG_PAD_IDX)

    prob, loss = jax.jit(slu_tagging_forward)(params, input_ids, tag_ids,
                                              tag_mask, lengths)
    jax.block_until_ready((prob, loss))

    assert prob.shape == (B, S, NUM_TAGS)
    assert bool(jnp.all(jnp.isfinite(prob))) and bool(jnp.isfinite(loss))
    # exact softmax now: rows sum to 1 up to fp rounding
    assert bool(jnp.allclose(jnp.sum(prob, axis=-1), 1.0, atol=1e-3))
    print("KERNEL_OK")
</pallas_src>

<mosaic_0001>
module attributes {stable_mosaic.version = 11 : i64} {
  func.func @slu_fused_kernel(%arg0: memref<16x32xf32, #tpu.memory_space<vmem>>, %arg1: memref<32x32xf32, #tpu.memory_space<vmem>>, %arg2: memref<32x32xf32, #tpu.memory_space<vmem>>, %arg3: memref<32x32xf32, #tpu.memory_space<vmem>>, %arg4: memref<32x32xf32, #tpu.memory_space<vmem>>, %arg5: memref<32x128xf32, #tpu.memory_space<vmem>>, %arg6: memref<128x32xf32, #tpu.memory_space<vmem>>, %arg7: memref<32x128xf32, #tpu.memory_space<vmem>>, %arg8: memref<32x128xf32, #tpu.memory_space<vmem>>, %arg9: memref<32x128xf32, #tpu.memory_space<vmem>>, %arg10: memref<12x128xf32, #tpu.memory_space<vmem>>, %arg11: memref<8x2x32xf32, #tpu.memory_space<vmem>>, %arg12: memref<16x1xf32, #tpu.memory_space<vmem>>, %arg13: memref<16x1xi32, #tpu.memory_space<vmem>>, %arg14: memref<16x128xf32, #tpu.memory_space<vmem>>, %arg15: memref<1x1xf32, #tpu.memory_space<vmem>>) attributes {dimension_semantics = [], scalar_prefetch = 0 : i64, scratch_operands = 0 : i64, tpu.core_type = #tpu.core_type<tc>} {
    %c0 = arith.constant 0 : index
    %c0_0 = arith.constant 0 : index
    %0 = vector.load %arg10[%c0, %c0_0] : memref<12x128xf32, #tpu.memory_space<vmem>>, vector<1x32xf32>
    %c1 = arith.constant 1 : index
    %c0_1 = arith.constant 0 : index
    %1 = vector.load %arg10[%c1, %c0_1] : memref<12x128xf32, #tpu.memory_space<vmem>>, vector<1x32xf32>
    %c2 = arith.constant 2 : index
    %c0_2 = arith.constant 0 : index
    %2 = vector.load %arg10[%c2, %c0_2] : memref<12x128xf32, #tpu.memory_space<vmem>>, vector<1x32xf32>
    %c3 = arith.constant 3 : index
    %c0_3 = arith.constant 0 : index
    %3 = vector.load %arg10[%c3, %c0_3] : memref<12x128xf32, #tpu.memory_space<vmem>>, vector<1x32xf32>
    %c4 = arith.constant 4 : index
    %c0_4 = arith.constant 0 : index
    %4 = vector.load %arg10[%c4, %c0_4] : memref<12x128xf32, #tpu.memory_space<vmem>>, vector<1x32xf32>
    %c5 = arith.constant 5 : index
    %c0_5 = arith.constant 0 : index
    %5 = vector.load %arg10[%c5, %c0_5] : memref<12x128xf32, #tpu.memory_space<vmem>>, vector<1x32xf32>
    %c6 = arith.constant 6 : index
    %c0_6 = arith.constant 0 : index
    %6 = vector.load %arg10[%c6, %c0_6] : memref<12x128xf32, #tpu.memory_space<vmem>>, vector<1x128xf32>
    %c7 = arith.constant 7 : index
    %c0_7 = arith.constant 0 : index
    %7 = vector.load %arg10[%c7, %c0_7] : memref<12x128xf32, #tpu.memory_space<vmem>>, vector<1x32xf32>
    %c8 = arith.constant 8 : index
    %c0_8 = arith.constant 0 : index
    %8 = vector.load %arg10[%c8, %c0_8] : memref<12x128xf32, #tpu.memory_space<vmem>>, vector<1x32xf32>
    %c9 = arith.constant 9 : index
    %c0_9 = arith.constant 0 : index
    %9 = vector.load %arg10[%c9, %c0_9] : memref<12x128xf32, #tpu.memory_space<vmem>>, vector<1x32xf32>
    %c10 = arith.constant 10 : index
    %c0_10 = arith.constant 0 : index
    %10 = vector.load %arg10[%c10, %c0_10] : memref<12x128xf32, #tpu.memory_space<vmem>>, vector<1x128xf32>
    %c11 = arith.constant 11 : index
    %c0_11 = arith.constant 0 : index
    %11 = vector.load %arg10[%c11, %c0_11] : memref<12x128xf32, #tpu.memory_space<vmem>>, vector<1x128xf32>
    %c0_12 = arith.constant 0 : index
    %c0_13 = arith.constant 0 : index
    %12 = vector.load %arg0[%c0_12, %c0_13] : memref<16x32xf32, #tpu.memory_space<vmem>>, vector<16x32xf32>
    %c0_14 = arith.constant 0 : index
    %c0_15 = arith.constant 0 : index
    %13 = vector.load %arg1[%c0_14, %c0_15] : memref<32x32xf32, #tpu.memory_space<vmem>>, vector<32x32xf32>
    %cst = arith.constant dense<0.000000e+00> : vector<16x32xf32>
    %14 = tpu.matmul %12, %13, %cst {dimension_numbers = #tpu.dot_dimension_numbers<[1], [0], [0], [1], [0, 0, 1, 1], [], []>} : vector<16x32xf32>, vector<32x32xf32>, vector<16x32xf32> -> vector<16x32xf32>
    %15 = vector.broadcast %0 : vector<1x32xf32> to vector<16x32xf32>
    %16 = arith.addf %14, %15 : vector<16x32xf32>
    %c0_16 = arith.constant 0 : index
    %c0_17 = arith.constant 0 : index
    %17 = vector.load %arg2[%c0_16, %c0_17] : memref<32x32xf32, #tpu.memory_space<vmem>>, vector<32x32xf32>
    %cst_18 = arith.constant dense<0.000000e+00> : vector<16x32xf32>
    %18 = tpu.matmul %12, %17, %cst_18 {dimension_numbers = #tpu.dot_dimension_numbers<[1], [0], [0], [1], [0, 0, 1, 1], [], []>} : vector<16x32xf32>, vector<32x32xf32>, vector<16x32xf32> -> vector<16x32xf32>
    %19 = vector.broadcast %1 : vector<1x32xf32> to vector<16x32xf32>
    %20 = arith.addf %18, %19 : vector<16x32xf32>
    %c0_19 = arith.constant 0 : index
    %c0_20 = arith.constant 0 : index
    %21 = vector.load %arg3[%c0_19, %c0_20] : memref<32x32xf32, #tpu.memory_space<vmem>>, vector<32x32xf32>
    %cst_21 = arith.constant dense<0.000000e+00> : vector<16x32xf32>
    %22 = tpu.matmul %12, %21, %cst_21 {dimension_numbers = #tpu.dot_dimension_numbers<[1], [0], [0], [1], [0, 0, 1, 1], [], []>} : vector<16x32xf32>, vector<32x32xf32>, vector<16x32xf32> -> vector<16x32xf32>
    %23 = vector.broadcast %2 : vector<1x32xf32> to vector<16x32xf32>
    %24 = arith.addf %22, %23 : vector<16x32xf32>
    %25 = vector.shape_cast %16 : vector<16x32xf32> to vector<2x8x32xf32>
    %26 = vector.shape_cast %20 : vector<16x32xf32> to vector<2x8x32xf32>
    %27 = vector.shape_cast %24 : vector<16x32xf32> to vector<2x8x32xf32>
    %28 = vector.extract_strided_slice %25 {offsets = [0, 0, 0], sizes = [2, 8, 8], strides = [1, 1, 1]} : vector<2x8x32xf32> to vector<2x8x8xf32>
    %29 = vector.extract_strided_slice %26 {offsets = [0, 0, 0], sizes = [2, 8, 8], strides = [1, 1, 1]} : vector<2x8x32xf32> to vector<2x8x8xf32>
    %30 = vector.extract_strided_slice %27 {offsets = [0, 0, 0], sizes = [2, 8, 8], strides = [1, 1, 1]} : vector<2x8x32xf32> to vector<2x8x8xf32>
    "tpu.trace_start"() <{level = 10 : i32, message = "bqd,bkd->bqk"}> : () -> ()
    %cst_22 = arith.constant dense<0.000000e+00> : vector<2x8x8xf32>
    %31 = tpu.matmul %28, %29, %cst_22 {dimension_numbers = #tpu.dot_dimension_numbers<[2], [2], [1], [1], [0, 0, 0, 1, 1, 1], [0], [0]>} : vector<2x8x8xf32>, vector<2x8x8xf32>, vector<2x8x8xf32> -> vector<2x8x8xf32>
    "tpu.trace_stop"() : () -> ()
    %cst_23 = arith.constant 0.353553385 : f32
    %32 = vector.broadcast %cst_23 : f32 to vector<2x8x8xf32>
    %33 = arith.mulf %31, %32 : vector<2x8x8xf32>
    %cst_24 = arith.constant dense<0xFF800000> : vector<2x8xf32>
    %34 = vector.multi_reduction <maximumf>, %33, %cst_24 [2] : vector<2x8x8xf32> to vector<2x8xf32>
    %35 = vector.shape_cast %34 : vector<2x8xf32> to vector<2x8x1xf32>
    %36 = vector.broadcast %35 : vector<2x8x1xf32> to vector<2x8x8xf32>
    %37 = arith.subf %33, %36 : vector<2x8x8xf32>
    %38 = math.exp %37 : vector<2x8x8xf32>
    %cst_25 = arith.constant dense<0.000000e+00> : vector<2x8xf32>
    %39 = vector.multi_reduction <add>, %38, %cst_25 [2] : vector<2x8x8xf32> to vector<2x8xf32>
    %40 = vector.shape_cast %39 : vector<2x8xf32> to vector<2x8x1xf32>
    %41 = tpu.reciprocal %40 {approx = true} : vector<2x8x1xf32> -> vector<2x8x1xf32>
    %42 = vector.broadcast %41 : vector<2x8x1xf32> to vector<2x8x8xf32>
    %43 = arith.mulf %38, %42 : vector<2x8x8xf32>
    "tpu.trace_start"() <{level = 10 : i32, message = "bqk,bkd->bqd"}> : () -> ()
    %cst_26 = arith.constant dense<0.000000e+00> : vector<2x8x8xf32>
    %44 = tpu.matmul %43, %30, %cst_26 {dimension_numbers = #tpu.dot_dimension_numbers<[2], [1], [1], [2], [0, 0, 0, 1, 1, 2], [0], [0]>} : vector<2x8x8xf32>, vector<2x8x8xf32>, vector<2x8x8xf32> -> vector<2x8x8xf32>
    "tpu.trace_stop"() : () -> ()
    %45 = vector.extract_strided_slice %25 {offsets = [0, 0, 8], sizes = [2, 8, 8], strides = [1, 1, 1]} : vector<2x8x32xf32> to vector<2x8x8xf32>
    %46 = vector.extract_strided_slice %26 {offsets = [0, 0, 8], sizes = [2, 8, 8], strides = [1, 1, 1]} : vector<2x8x32xf32> to vector<2x8x8xf32>
    %47 = vector.extract_strided_slice %27 {offsets = [0, 0, 8], sizes = [2, 8, 8], strides = [1, 1, 1]} : vector<2x8x32xf32> to vector<2x8x8xf32>
    "tpu.trace_start"() <{level = 10 : i32, message = "bqd,bkd->bqk"}> : () -> ()
    %cst_27 = arith.constant dense<0.000000e+00> : vector<2x8x8xf32>
    %48 = tpu.matmul %45, %46, %cst_27 {dimension_numbers = #tpu.dot_dimension_numbers<[2], [2], [1], [1], [0, 0, 0, 1, 1, 1], [0], [0]>} : vector<2x8x8xf32>, vector<2x8x8xf32>, vector<2x8x8xf32> -> vector<2x8x8xf32>
    "tpu.trace_stop"() : () -> ()
    %cst_28 = arith.constant 0.353553385 : f32
    %49 = vector.broadcast %cst_28 : f32 to vector<2x8x8xf32>
    %50 = arith.mulf %48, %49 : vector<2x8x8xf32>
    %cst_29 = arith.constant dense<0xFF800000> : vector<2x8xf32>
    %51 = vector.multi_reduction <maximumf>, %50, %cst_29 [2] : vector<2x8x8xf32> to vector<2x8xf32>
    %52 = vector.shape_cast %51 : vector<2x8xf32> to vector<2x8x1xf32>
    %53 = vector.broadcast %52 : vector<2x8x1xf32> to vector<2x8x8xf32>
    %54 = arith.subf %50, %53 : vector<2x8x8xf32>
    %55 = math.exp %54 : vector<2x8x8xf32>
    %cst_30 = arith.constant dense<0.000000e+00> : vector<2x8xf32>
    %56 = vector.multi_reduction <add>, %55, %cst_30 [2] : vector<2x8x8xf32> to vector<2x8xf32>
    %57 = vector.shape_cast %56 : vector<2x8xf32> to vector<2x8x1xf32>
    %58 = tpu.reciprocal %57 {approx = true} : vector<2x8x1xf32> -> vector<2x8x1xf32>
    %59 = vector.broadcast %58 : vector<2x8x1xf32> to vector<2x8x8xf32>
    %60 = arith.mulf %55, %59 : vector<2x8x8xf32>
    "tpu.trace_start"() <{level = 10 : i32, message = "bqk,bkd->bqd"}> : () -> ()
    %cst_31 = arith.constant dense<0.000000e+00> : vector<2x8x8xf32>
    %61 = tpu.matmul %60, %47, %cst_31 {dimension_numbers = #tpu.dot_dimension_numbers<[2], [1], [1], [2], [0, 0, 0, 1, 1, 2], [0], [0]>} : vector<2x8x8xf32>, vector<2x8x8xf32>, vector<2x8x8xf32> -> vector<2x8x8xf32>
    "tpu.trace_stop"() : () -> ()
    %62 = vector.extract_strided_slice %25 {offsets = [0, 0, 16], sizes = [2, 8, 8], strides = [1, 1, 1]} : vector<2x8x32xf32> to vector<2x8x8xf32>
    %63 = vector.extract_strided_slice %26 {offsets = [0, 0, 16], sizes = [2, 8, 8], strides = [1, 1, 1]} : vector<2x8x32xf32> to vector<2x8x8xf32>
    %64 = vector.extract_strided_slice %27 {offsets = [0, 0, 16], sizes = [2, 8, 8], strides = [1, 1, 1]} : vector<2x8x32xf32> to vector<2x8x8xf32>
    "tpu.trace_start"() <{level = 10 : i32, message = "bqd,bkd->bqk"}> : () -> ()
    %cst_32 = arith.constant dense<0.000000e+00> : vector<2x8x8xf32>
    %65 = tpu.matmul %62, %63, %cst_32 {dimension_numbers = #tpu.dot_dimension_numbers<[2], [2], [1], [1], [0, 0, 0, 1, 1, 1], [0], [0]>} : vector<2x8x8xf32>, vector<2x8x8xf32>, vector<2x8x8xf32> -> vector<2x8x8xf32>
    "tpu.trace_stop"() : () -> ()
    %cst_33 = arith.constant 0.353553385 : f32
    %66 = vector.broadcast %cst_33 : f32 to vector<2x8x8xf32>
    %67 = arith.mulf %65, %66 : vector<2x8x8xf32>
    %cst_34 = arith.constant dense<0xFF800000> : vector<2x8xf32>
    %68 = vector.multi_reduction <maximumf>, %67, %cst_34 [2] : vector<2x8x8xf32> to vector<2x8xf32>
    %69 = vector.shape_cast %68 : vector<2x8xf32> to vector<2x8x1xf32>
    %70 = vector.broadcast %69 : vector<2x8x1xf32> to vector<2x8x8xf32>
    %71 = arith.subf %67, %70 : vector<2x8x8xf32>
    %72 = math.exp %71 : vector<2x8x8xf32>
    %cst_35 = arith.constant dense<0.000000e+00> : vector<2x8xf32>
    %73 = vector.multi_reduction <add>, %72, %cst_35 [2] : vector<2x8x8xf32> to vector<2x8xf32>
    %74 = vector.shape_cast %73 : vector<2x8xf32> to vector<2x8x1xf32>
    %75 = tpu.reciprocal %74 {approx = true} : vector<2x8x1xf32> -> vector<2x8x1xf32>
    %76 = vector.broadcast %75 : vector<2x8x1xf32> to vector<2x8x8xf32>
    %77 = arith.mulf %72, %76 : vector<2x8x8xf32>
    "tpu.trace_start"() <{level = 10 : i32, message = "bqk,bkd->bqd"}> : () -> ()
    %cst_36 = arith.constant dense<0.000000e+00> : vector<2x8x8xf32>
    %78 = tpu.matmul %77, %64, %cst_36 {dimension_numbers = #tpu.dot_dimension_numbers<[2], [1], [1], [2], [0, 0, 0, 1, 1, 2], [0], [0]>} : vector<2x8x8xf32>, vector<2x8x8xf32>, vector<2x8x8xf32> -> vector<2x8x8xf32>
    "tpu.trace_stop"() : () -> ()
    %79 = vector.extract_strided_slice %25 {offsets = [0, 0, 24], sizes = [2, 8, 8], strides = [1, 1, 1]} : vector<2x8x32xf32> to vector<2x8x8xf32>
    %80 = vector.extract_strided_slice %26 {offsets = [0, 0, 24], sizes = [2, 8, 8], strides = [1, 1, 1]} : vector<2x8x32xf32> to vector<2x8x8xf32>
    %81 = vector.extract_strided_slice %27 {offsets = [0, 0, 24], sizes = [2, 8, 8], strides = [1, 1, 1]} : vector<2x8x32xf32> to vector<2x8x8xf32>
    "tpu.trace_start"() <{level = 10 : i32, message = "bqd,bkd->bqk"}> : () -> ()
    %cst_37 = arith.constant dense<0.000000e+00> : vector<2x8x8xf32>
    %82 = tpu.matmul %79, %80, %cst_37 {dimension_numbers = #tpu.dot_dimension_numbers<[2], [2], [1], [1], [0, 0, 0, 1, 1, 1], [0], [0]>} : vector<2x8x8xf32>, vector<2x8x8xf32>, vector<2x8x8xf32> -> vector<2x8x8xf32>
    "tpu.trace_stop"() : () -> ()
    %cst_38 = arith.constant 0.353553385 : f32
    %83 = vector.broadcast %cst_38 : f32 to vector<2x8x8xf32>
    %84 = arith.mulf %82, %83 : vector<2x8x8xf32>
    %cst_39 = arith.constant dense<0xFF800000> : vector<2x8xf32>
    %85 = vector.multi_reduction <maximumf>, %84, %cst_39 [2] : vector<2x8x8xf32> to vector<2x8xf32>
    %86 = vector.shape_cast %85 : vector<2x8xf32> to vector<2x8x1xf32>
    %87 = vector.broadcast %86 : vector<2x8x1xf32> to vector<2x8x8xf32>
    %88 = arith.subf %84, %87 : vector<2x8x8xf32>
    %89 = math.exp %88 : vector<2x8x8xf32>
    %cst_40 = arith.constant dense<0.000000e+00> : vector<2x8xf32>
    %90 = vector.multi_reduction <add>, %89, %cst_40 [2] : vector<2x8x8xf32> to vector<2x8xf32>
    %91 = vector.shape_cast %90 : vector<2x8xf32> to vector<2x8x1xf32>
    %92 = tpu.reciprocal %91 {approx = true} : vector<2x8x1xf32> -> vector<2x8x1xf32>
    %93 = vector.broadcast %92 : vector<2x8x1xf32> to vector<2x8x8xf32>
    %94 = arith.mulf %89, %93 : vector<2x8x8xf32>
    "tpu.trace_start"() <{level = 10 : i32, message = "bqk,bkd->bqd"}> : () -> ()
    %cst_41 = arith.constant dense<0.000000e+00> : vector<2x8x8xf32>
    %95 = tpu.matmul %94, %81, %cst_41 {dimension_numbers = #tpu.dot_dimension_numbers<[2], [1], [1], [2], [0, 0, 0, 1, 1, 2], [0], [0]>} : vector<2x8x8xf32>, vector<2x8x8xf32>, vector<2x8x8xf32> -> vector<2x8x8xf32>
    "tpu.trace_stop"() : () -> ()
    %96 = tpu.concatenate %44, %61, %78, %95 in 2 : vector<2x8x8xf32>, vector<2x8x8xf32>, vector<2x8x8xf32>, vector<2x8x8xf32> -> vector<2x8x32xf32>
    %97 = vector.shape_cast %96 : vector<2x8x32xf32> to vector<16x32xf32>
    %c0_42 = arith.constant 0 : index
    %c0_43 = arith.constant 0 : index
    %98 = vector.load %arg4[%c0_42, %c0_43] : memref<32x32xf32, #tpu.memory_space<vmem>>, vector<32x32xf32>
    %cst_44 = arith.constant dense<0.000000e+00> : vector<16x32xf32>
    %99 = tpu.matmul %97, %98, %cst_44 {dimension_numbers = #tpu.dot_dimension_numbers<[1], [0], [0], [1], [0, 0, 1, 1], [], []>} : vector<16x32xf32>, vector<32x32xf32>, vector<16x32xf32> -> vector<16x32xf32>
    %100 = vector.broadcast %3 : vector<1x32xf32> to vector<16x32xf32>
    %101 = arith.addf %99, %100 : vector<16x32xf32>
    %102 = arith.addf %12, %101 : vector<16x32xf32>
    %cst_45 = arith.constant dense<0.000000e+00> : vector<16xf32>
    %103 = vector.multi_reduction <add>, %102, %cst_45 [1] : vector<16x32xf32> to vector<16xf32>
    %104 = vector.shape_cast %103 : vector<16xf32> to vector<16x1xf32>
    %cst_46 = arith.constant 3.200000e+01 : f32
    %105 = vector.broadcast %cst_46 : f32 to vector<16x1xf32>
    %106 = arith.divf %104, %105 : vector<16x1xf32>
    %107 = vector.broadcast %106 : vector<16x1xf32> to vector<16x32xf32>
    %108 = arith.subf %102, %107 : vector<16x32xf32>
    %109 = arith.mulf %108, %108 : vector<16x32xf32>
    %cst_47 = arith.constant dense<0.000000e+00> : vector<16xf32>
    %110 = vector.multi_reduction <add>, %109, %cst_47 [1] : vector<16x32xf32> to vector<16xf32>
    %111 = vector.shape_cast %110 : vector<16xf32> to vector<16x1xf32>
    %cst_48 = arith.constant 3.200000e+01 : f32
    %112 = vector.broadcast %cst_48 : f32 to vector<16x1xf32>
    %113 = arith.divf %111, %112 : vector<16x1xf32>
    %114 = vector.broadcast %106 : vector<16x1xf32> to vector<16x32xf32>
    %115 = arith.subf %102, %114 : vector<16x32xf32>
    %cst_49 = arith.constant 9.99999974E-6 : f32
    %116 = vector.broadcast %cst_49 : f32 to vector<16x1xf32>
    %117 = arith.addf %113, %116 : vector<16x1xf32>
    %118 = math.rsqrt %117 : vector<16x1xf32>
    %119 = vector.broadcast %118 : vector<16x1xf32> to vector<16x32xf32>
    %120 = arith.mulf %115, %119 : vector<16x32xf32>
    %121 = vector.broadcast %4 : vector<1x32xf32> to vector<16x32xf32>
    %122 = arith.mulf %120, %121 : vector<16x32xf32>
    %123 = vector.broadcast %5 : vector<1x32xf32> to vector<16x32xf32>
    %124 = arith.addf %122, %123 : vector<16x32xf32>
    %c0_50 = arith.constant 0 : index
    %c0_51 = arith.constant 0 : index
    %125 = vector.load %arg5[%c0_50, %c0_51] : memref<32x128xf32, #tpu.memory_space<vmem>>, vector<32x128xf32>
    %cst_52 = arith.constant dense<0.000000e+00> : vector<16x128xf32>
    %126 = tpu.matmul %124, %125, %cst_52 {dimension_numbers = #tpu.dot_dimension_numbers<[1], [0], [0], [1], [0, 0, 1, 1], [], []>} : vector<16x32xf32>, vector<32x128xf32>, vector<16x128xf32> -> vector<16x128xf32>
    %127 = vector.broadcast %6 : vector<1x128xf32> to vector<16x128xf32>
    %128 = arith.addf %126, %127 : vector<16x128xf32>
    %cst_53 = arith.constant 0.000000e+00 : f32
    %129 = vector.broadcast %cst_53 : f32 to vector<16x128xf32>
    %130 = arith.maximumf %128, %129 : vector<16x128xf32>
    %c0_54 = arith.constant 0 : index
    %c0_55 = arith.constant 0 : index
    %131 = vector.load %arg6[%c0_54, %c0_55] : memref<128x32xf32, #tpu.memory_space<vmem>>, vector<128x32xf32>
    %cst_56 = arith.constant dense<0.000000e+00> : vector<16x32xf32>
    %132 = tpu.matmul %130, %131, %cst_56 {dimension_numbers = #tpu.dot_dimension_numbers<[1], [0], [0], [1], [0, 0, 1, 1], [], []>} : vector<16x128xf32>, vector<128x32xf32>, vector<16x32xf32> -> vector<16x32xf32>
    %133 = vector.broadcast %7 : vector<1x32xf32> to vector<16x32xf32>
    %134 = arith.addf %132, %133 : vector<16x32xf32>
    %135 = arith.addf %124, %134 : vector<16x32xf32>
    %cst_57 = arith.constant dense<0.000000e+00> : vector<16xf32>
    %136 = vector.multi_reduction <add>, %135, %cst_57 [1] : vector<16x32xf32> to vector<16xf32>
    %137 = vector.shape_cast %136 : vector<16xf32> to vector<16x1xf32>
    %cst_58 = arith.constant 3.200000e+01 : f32
    %138 = vector.broadcast %cst_58 : f32 to vector<16x1xf32>
    %139 = arith.divf %137, %138 : vector<16x1xf32>
    %140 = vector.broadcast %139 : vector<16x1xf32> to vector<16x32xf32>
    %141 = arith.subf %135, %140 : vector<16x32xf32>
    %142 = arith.mulf %141, %141 : vector<16x32xf32>
    %cst_59 = arith.constant dense<0.000000e+00> : vector<16xf32>
    %143 = vector.multi_reduction <add>, %142, %cst_59 [1] : vector<16x32xf32> to vector<16xf32>
    %144 = vector.shape_cast %143 : vector<16xf32> to vector<16x1xf32>
    %cst_60 = arith.constant 3.200000e+01 : f32
    %145 = vector.broadcast %cst_60 : f32 to vector<16x1xf32>
    %146 = arith.divf %144, %145 : vector<16x1xf32>
    %147 = vector.broadcast %139 : vector<16x1xf32> to vector<16x32xf32>
    %148 = arith.subf %135, %147 : vector<16x32xf32>
    %cst_61 = arith.constant 9.99999974E-6 : f32
    %149 = vector.broadcast %cst_61 : f32 to vector<16x1xf32>
    %150 = arith.addf %146, %149 : vector<16x1xf32>
    %151 = math.rsqrt %150 : vector<16x1xf32>
    %152 = vector.broadcast %151 : vector<16x1xf32> to vector<16x32xf32>
    %153 = arith.mulf %148, %152 : vector<16x32xf32>
    %154 = vector.broadcast %8 : vector<1x32xf32> to vector<16x32xf32>
    %155 = arith.mulf %153, %154 : vector<16x32xf32>
    %156 = vector.broadcast %9 : vector<1x32xf32> to vector<16x32xf32>
    %157 = arith.addf %155, %156 : vector<16x32xf32>
    %158 = arith.addf %157, %12 : vector<16x32xf32>
    %c0_62 = arith.constant 0 : index
    %c0_63 = arith.constant 0 : index
    %159 = vector.load %arg7[%c0_62, %c0_63] : memref<32x128xf32, #tpu.memory_space<vmem>>, vector<32x128xf32>
    %cst_64 = arith.constant dense<0.000000e+00> : vector<16x128xf32>
    %160 = tpu.matmul %158, %159, %cst_64 {dimension_numbers = #tpu.dot_dimension_numbers<[1], [0], [0], [1], [0, 0, 1, 1], [], []>} : vector<16x32xf32>, vector<32x128xf32>, vector<16x128xf32> -> vector<16x128xf32>
    %161 = vector.broadcast %10 : vector<1x128xf32> to vector<16x128xf32>
    %162 = arith.addf %160, %161 : vector<16x128xf32>
    %163 = vector.shape_cast %162 : vector<16x128xf32> to vector<2x8x128xf32>
    %164 = tpu.iota {dimensions = array<i32: 1>} : vector<1x128xi32>
    %c31_i32 = arith.constant 31 : i32
    %165 = vector.broadcast %c31_i32 : i32 to vector<1x128xi32>
    %166 = arith.andi %164, %165 : vector<1x128xi32>
    %c16_i32 = arith.constant 16 : i32
    %167 = vector.broadcast %c16_i32 : i32 to vector<1x128xi32>
    %168 = arith.cmpi slt, %166, %167 : vector<1x128xi32>
    %169 = vector.extract_strided_slice %163 {offsets = [0, 0, 0], sizes = [2, 1, 128], strides = [1, 1, 1]} : vector<2x8x128xf32> to vector<2x1x128xf32>
    %170 = vector.shape_cast %169 : vector<2x1x128xf32> to vector<2x128xf32>
    %171 = vector.extract_strided_slice %163 {offsets = [0, 7, 0], sizes = [2, 1, 128], strides = [1, 1, 1]} : vector<2x8x128xf32> to vector<2x1x128xf32>
    %172 = vector.shape_cast %171 : vector<2x1x128xf32> to vector<2x128xf32>
    %173 = vector.shape_cast %168 : vector<1x128xi1> to vector<1x128xi1>
    %174 = vector.broadcast %173 : vector<1x128xi1> to vector<2x128xi1>
    %175 = arith.select %174, %170, %172 : vector<2x128xi1>, vector<2x128xf32>
    %176 = vector.extract_strided_slice %163 {offsets = [0, 1, 0], sizes = [2, 1, 128], strides = [1, 1, 1]} : vector<2x8x128xf32> to vector<2x1x128xf32>
    %177 = vector.shape_cast %176 : vector<2x1x128xf32> to vector<2x128xf32>
    %178 = vector.extract_strided_slice %163 {offsets = [0, 6, 0], sizes = [2, 1, 128], strides = [1, 1, 1]} : vector<2x8x128xf32> to vector<2x1x128xf32>
    %179 = vector.shape_cast %178 : vector<2x1x128xf32> to vector<2x128xf32>
    %180 = vector.shape_cast %168 : vector<1x128xi1> to vector<1x128xi1>
    %181 = vector.broadcast %180 : vector<1x128xi1> to vector<2x128xi1>
    %182 = arith.select %181, %177, %179 : vector<2x128xi1>, vector<2x128xf32>
    %183 = vector.extract_strided_slice %163 {offsets = [0, 2, 0], sizes = [2, 1, 128], strides = [1, 1, 1]} : vector<2x8x128xf32> to vector<2x1x128xf32>
    %184 = vector.shape_cast %183 : vector<2x1x128xf32> to vector<2x128xf32>
    %185 = vector.extract_strided_slice %163 {offsets = [0, 5, 0], sizes = [2, 1, 128], strides = [1, 1, 1]} : vector<2x8x128xf32> to vector<2x1x128xf32>
    %186 = vector.shape_cast %185 : vector<2x1x128xf32> to vector<2x128xf32>
    %187 = vector.shape_cast %168 : vector<1x128xi1> to vector<1x128xi1>
    %188 = vector.broadcast %187 : vector<1x128xi1> to vector<2x128xi1>
    %189 = arith.select %188, %184, %186 : vector<2x128xi1>, vector<2x128xf32>
    %190 = vector.extract_strided_slice %163 {offsets = [0, 3, 0], sizes = [2, 1, 128], strides = [1, 1, 1]} : vector<2x8x128xf32> to vector<2x1x128xf32>
    %191 = vector.shape_cast %190 : vector<2x1x128xf32> to vector<2x128xf32>
    %192 = vector.extract_strided_slice %163 {offsets = [0, 4, 0], sizes = [2, 1, 128], strides = [1, 1, 1]} : vector<2x8x128xf32> to vector<2x1x128xf32>
    %193 = vector.shape_cast %192 : vector<2x1x128xf32> to vector<2x128xf32>
    %194 = vector.shape_cast %168 : vector<1x128xi1> to vector<1x128xi1>
    %195 = vector.broadcast %194 : vector<1x128xi1> to vector<2x128xi1>
    %196 = arith.select %195, %191, %193 : vector<2x128xi1>, vector<2x128xf32>
    %197 = vector.extract_strided_slice %163 {offsets = [0, 4, 0], sizes = [2, 1, 128], strides = [1, 1, 1]} : vector<2x8x128xf32> to vector<2x1x128xf32>
    %198 = vector.shape_cast %197 : vector<2x1x128xf32> to vector<2x128xf32>
    %199 = vector.extract_strided_slice %163 {offsets = [0, 3, 0], sizes = [2, 1, 128], strides = [1, 1, 1]} : vector<2x8x128xf32> to vector<2x1x128xf32>
    %200 = vector.shape_cast %199 : vector<2x1x128xf32> to vector<2x128xf32>
    %201 = vector.shape_cast %168 : vector<1x128xi1> to vector<1x128xi1>
    %202 = vector.broadcast %201 : vector<1x128xi1> to vector<2x128xi1>
    %203 = arith.select %202, %198, %200 : vector<2x128xi1>, vector<2x128xf32>
    %204 = vector.extract_strided_slice %163 {offsets = [0, 5, 0], sizes = [2, 1, 128], strides = [1, 1, 1]} : vector<2x8x128xf32> to vector<2x1x128xf32>
    %205 = vector.shape_cast %204 : vector<2x1x128xf32> to vector<2x128xf32>
    %206 = vector.extract_strided_slice %163 {offsets = [0, 2, 0], sizes = [2, 1, 128], strides = [1, 1, 1]} : vector<2x8x128xf32> to vector<2x1x128xf32>
    %207 = vector.shape_cast %206 : vector<2x1x128xf32> to vector<2x128xf32>
    %208 = vector.shape_cast %168 : vector<1x128xi1> to vector<1x128xi1>
    %209 = vector.broadcast %208 : vector<1x128xi1> to vector<2x128xi1>
    %210 = arith.select %209, %205, %207 : vector<2x128xi1>, vector<2x128xf32>
    %211 = vector.extract_strided_slice %163 {offsets = [0, 6, 0], sizes = [2, 1, 128], strides = [1, 1, 1]} : vector<2x8x128xf32> to vector<2x1x128xf32>
    %212 = vector.shape_cast %211 : vector<2x1x128xf32> to vector<2x128xf32>
    %213 = vector.extract_strided_slice %163 {offsets = [0, 1, 0], sizes = [2, 1, 128], strides = [1, 1, 1]} : vector<2x8x128xf32> to vector<2x1x128xf32>
    %214 = vector.shape_cast %213 : vector<2x1x128xf32> to vector<2x128xf32>
    %215 = vector.shape_cast %168 : vector<1x128xi1> to vector<1x128xi1>
    %216 = vector.broadcast %215 : vector<1x128xi1> to vector<2x128xi1>
    %217 = arith.select %216, %212, %214 : vector<2x128xi1>, vector<2x128xf32>
    %218 = vector.extract_strided_slice %163 {offsets = [0, 7, 0], sizes = [2, 1, 128], strides = [1, 1, 1]} : vector<2x8x128xf32> to vector<2x1x128xf32>
    %219 = vector.shape_cast %218 : vector<2x1x128xf32> to vector<2x128xf32>
    %220 = vector.extract_strided_slice %163 {offsets = [0, 0, 0], sizes = [2, 1, 128], strides = [1, 1, 1]} : vector<2x8x128xf32> to vector<2x1x128xf32>
    %221 = vector.shape_cast %220 : vector<2x1x128xf32> to vector<2x128xf32>
    %222 = vector.shape_cast %168 : vector<1x128xi1> to vector<1x128xi1>
    %223 = vector.broadcast %222 : vector<1x128xi1> to vector<2x128xi1>
    %224 = arith.select %223, %219, %221 : vector<2x128xi1>, vector<2x128xf32>
    %c0_65 = arith.constant 0 : index
    %c0_66 = arith.constant 0 : index
    %c0_67 = arith.constant 0 : index
    %225 = vector.load %arg11[%c0_65, %c0_66, %c0_67] : memref<8x2x32xf32, #tpu.memory_space<vmem>>, vector<8x2x32xf32>
    %c0_68 = arith.constant 0 : index
    %c0_69 = arith.constant 0 : index
    %226 = vector.load %arg8[%c0_68, %c0_69] : memref<32x128xf32, #tpu.memory_space<vmem>>, vector<32x128xf32>
    %cst_70 = arith.constant 0.000000e+00 : f32
    %227 = vector.broadcast %cst_70 : f32 to vector<2x32xf32>
    %cst_71 = arith.constant 0.000000e+00 : f32
    %228 = vector.broadcast %cst_71 : f32 to vector<2x32xf32>
    %cst_72 = arith.constant dense<0.000000e+00> : vector<2x128xf32>
    %229 = tpu.matmul %227, %226, %cst_72 {dimension_numbers = #tpu.dot_dimension_numbers<[1], [0], [0], [1], [0, 0, 1, 1], [], []>} : vector<2x32xf32>, vector<32x128xf32>, vector<2x128xf32> -> vector<2x128xf32>
    %230 = arith.addf %175, %229 : vector<2x128xf32>
    %231 = vector.extract_strided_slice %230 {offsets = [0, 0], sizes = [2, 96], strides = [1, 1]} : vector<2x128xf32> to vector<2x96xf32>
    %232 = arith.negf %231 : vector<2x96xf32>
    %233 = math.exp %232 : vector<2x96xf32>
    %cst_73 = arith.constant 1.000000e+00 : f32
    %234 = vector.broadcast %cst_73 : f32 to vector<2x96xf32>
    %235 = arith.addf %234, %233 : vector<2x96xf32>
    %236 = arith.divf %234, %235 : vector<2x96xf32>
    %237 = vector.extract_strided_slice %236 {offsets = [0, 0], sizes = [2, 32], strides = [1, 1]} : vector<2x96xf32> to vector<2x32xf32>
    %238 = vector.extract_strided_slice %236 {offsets = [0, 32], sizes = [2, 32], strides = [1, 1]} : vector<2x96xf32> to vector<2x32xf32>
    %239 = vector.extract_strided_slice %236 {offsets = [0, 64], sizes = [2, 32], strides = [1, 1]} : vector<2x96xf32> to vector<2x32xf32>
    %240 = vector.extract_strided_slice %230 {offsets = [0, 96], sizes = [2, 32], strides = [1, 1]} : vector<2x128xf32> to vector<2x32xf32>
    %241 = math.tanh %240 : vector<2x32xf32>
    %242 = arith.mulf %238, %228 : vector<2x32xf32>
    %243 = arith.mulf %237, %241 : vector<2x32xf32>
    %244 = arith.addf %242, %243 : vector<2x32xf32>
    %245 = math.tanh %244 : vector<2x32xf32>
    %246 = arith.mulf %239, %245 : vector<2x32xf32>
    %247 = vector.extract_strided_slice %225 {offsets = [0, 0, 0], sizes = [1, 2, 32], strides = [1, 1, 1]} : vector<8x2x32xf32> to vector<1x2x32xf32>
    %248 = vector.shape_cast %247 : vector<1x2x32xf32> to vector<2x32xf32>
    %249 = vector.extract_strided_slice %246 {offsets = [0, 0], sizes = [2, 16], strides = [1, 1]} : vector<2x32xf32> to vector<2x16xf32>
    %250 = vector.extract_strided_slice %248 {offsets = [0, 0], sizes = [2, 16], strides = [1, 1]} : vector<2x32xf32> to vector<2x16xf32>
    %251 = arith.mulf %249, %250 : vector<2x16xf32>
    %252 = vector.extract_strided_slice %246 {offsets = [0, 16], sizes = [2, 16], strides = [1, 1]} : vector<2x32xf32> to vector<2x16xf32>
    %253 = vector.extract_strided_slice %248 {offsets = [0, 16], sizes = [2, 16], strides = [1, 1]} : vector<2x32xf32> to vector<2x16xf32>
    %254 = arith.mulf %252, %253 : vector<2x16xf32>
    %cst_74 = arith.constant 0.000000e+00 : f32
    %255 = vector.broadcast %cst_74 : f32 to vector<2x32xf32>
    %256 = arith.cmpf ogt, %248, %255 : vector<2x32xf32>
    %257 = arith.select %256, %246, %227 : vector<2x32xi1>, vector<2x32xf32>
    %cst_75 = arith.constant 0.000000e+00 : f32
    %258 = vector.broadcast %cst_75 : f32 to vector<2x32xf32>
    %259 = arith.cmpf ogt, %248, %258 : vector<2x32xf32>
    %260 = arith.select %259, %244, %228 : vector<2x32xi1>, vector<2x32xf32>
    %cst_76 = arith.constant dense<0.000000e+00> : vector<2x128xf32>
    %261 = tpu.matmul %257, %226, %cst_76 {dimension_numbers = #tpu.dot_dimension_numbers<[1], [0], [0], [1], [0, 0, 1, 1], [], []>} : vector<2x32xf32>, vector<32x128xf32>, vector<2x128xf32> -> vector<2x128xf32>
    %262 = arith.addf %182, %261 : vector<2x128xf32>
    %263 = vector.extract_strided_slice %262 {offsets = [0, 0], sizes = [2, 96], strides = [1, 1]} : vector<2x128xf32> to vector<2x96xf32>
    %264 = arith.negf %263 : vector<2x96xf32>
    %265 = math.exp %264 : vector<2x96xf32>
    %cst_77 = arith.constant 1.000000e+00 : f32
    %266 = vector.broadcast %cst_77 : f32 to vector<2x96xf32>
    %267 = arith.addf %266, %265 : vector<2x96xf32>
    %268 = arith.divf %266, %267 : vector<2x96xf32>
    %269 = vector.extract_strided_slice %268 {offsets = [0, 0], sizes = [2, 32], strides = [1, 1]} : vector<2x96xf32> to vector<2x32xf32>
    %270 = vector.extract_strided_slice %268 {offsets = [0, 32], sizes = [2, 32], strides = [1, 1]} : vector<2x96xf32> to vector<2x32xf32>
    %271 = vector.extract_strided_slice %268 {offsets = [0, 64], sizes = [2, 32], strides = [1, 1]} : vector<2x96xf32> to vector<2x32xf32>
    %272 = vector.extract_strided_slice %262 {offsets = [0, 96], sizes = [2, 32], strides = [1, 1]} : vector<2x128xf32> to vector<2x32xf32>
    %273 = math.tanh %272 : vector<2x32xf32>
    %274 = arith.mulf %270, %260 : vector<2x32xf32>
    %275 = arith.mulf %269, %273 : vector<2x32xf32>
    %276 = arith.addf %274, %275 : vector<2x32xf32>
    %277 = math.tanh %276 : vector<2x32xf32>
    %278 = arith.mulf %271, %277 : vector<2x32xf32>
    %279 = vector.extract_strided_slice %225 {offsets = [1, 0, 0], sizes = [1, 2, 32], strides = [1, 1, 1]} : vector<8x2x32xf32> to vector<1x2x32xf32>
    %280 = vector.shape_cast %279 : vector<1x2x32xf32> to vector<2x32xf32>
    %281 = vector.extract_strided_slice %278 {offsets = [0, 0], sizes = [2, 16], strides = [1, 1]} : vector<2x32xf32> to vector<2x16xf32>
    %282 = vector.extract_strided_slice %280 {offsets = [0, 0], sizes = [2, 16], strides = [1, 1]} : vector<2x32xf32> to vector<2x16xf32>
    %283 = arith.mulf %281, %282 : vector<2x16xf32>
    %284 = vector.extract_strided_slice %278 {offsets = [0, 16], sizes = [2, 16], strides = [1, 1]} : vector<2x32xf32> to vector<2x16xf32>
    %285 = vector.extract_strided_slice %280 {offsets = [0, 16], sizes = [2, 16], strides = [1, 1]} : vector<2x32xf32> to vector<2x16xf32>
    %286 = arith.mulf %284, %285 : vector<2x16xf32>
    %cst_78 = arith.constant 0.000000e+00 : f32
    %287 = vector.broadcast %cst_78 : f32 to vector<2x32xf32>
    %288 = arith.cmpf ogt, %280, %287 : vector<2x32xf32>
    %289 = arith.select %288, %278, %257 : vector<2x32xi1>, vector<2x32xf32>
    %cst_79 = arith.constant 0.000000e+00 : f32
    %290 = vector.broadcast %cst_79 : f32 to vector<2x32xf32>
    %291 = arith.cmpf ogt, %280, %290 : vector<2x32xf32>
    %292 = arith.select %291, %276, %260 : vector<2x32xi1>, vector<2x32xf32>
    %cst_80 = arith.constant dense<0.000000e+00> : vector<2x128xf32>
    %293 = tpu.matmul %289, %226, %cst_80 {dimension_numbers = #tpu.dot_dimension_numbers<[1], [0], [0], [1], [0, 0, 1, 1], [], []>} : vector<2x32xf32>, vector<32x128xf32>, vector<2x128xf32> -> vector<2x128xf32>
    %294 = arith.addf %189, %293 : vector<2x128xf32>
    %295 = vector.extract_strided_slice %294 {offsets = [0, 0], sizes = [2, 96], strides = [1, 1]} : vector<2x128xf32> to vector<2x96xf32>
    %296 = arith.negf %295 : vector<2x96xf32>
    %297 = math.exp %296 : vector<2x96xf32>
    %cst_81 = arith.constant 1.000000e+00 : f32
    %298 = vector.broadcast %cst_81 : f32 to vector<2x96xf32>
    %299 = arith.addf %298, %297 : vector<2x96xf32>
    %300 = arith.divf %298, %299 : vector<2x96xf32>
    %301 = vector.extract_strided_slice %300 {offsets = [0, 0], sizes = [2, 32], strides = [1, 1]} : vector<2x96xf32> to vector<2x32xf32>
    %302 = vector.extract_strided_slice %300 {offsets = [0, 32], sizes = [2, 32], strides = [1, 1]} : vector<2x96xf32> to vector<2x32xf32>
    %303 = vector.extract_strided_slice %300 {offsets = [0, 64], sizes = [2, 32], strides = [1, 1]} : vector<2x96xf32> to vector<2x32xf32>
    %304 = vector.extract_strided_slice %294 {offsets = [0, 96], sizes = [2, 32], strides = [1, 1]} : vector<2x128xf32> to vector<2x32xf32>
    %305 = math.tanh %304 : vector<2x32xf32>
    %306 = arith.mulf %302, %292 : vector<2x32xf32>
    %307 = arith.mulf %301, %305 : vector<2x32xf32>
    %308 = arith.addf %306, %307 : vector<2x32xf32>
    %309 = math.tanh %308 : vector<2x32xf32>
    %310 = arith.mulf %303, %309 : vector<2x32xf32>
    %311 = vector.extract_strided_slice %225 {offsets = [2, 0, 0], sizes = [1, 2, 32], strides = [1, 1, 1]} : vector<8x2x32xf32> to vector<1x2x32xf32>
    %312 = vector.shape_cast %311 : vector<1x2x32xf32> to vector<2x32xf32>
    %313 = vector.extract_strided_slice %310 {offsets = [0, 0], sizes = [2, 16], strides = [1, 1]} : vector<2x32xf32> to vector<2x16xf32>
    %314 = vector.extract_strided_slice %312 {offsets = [0, 0], sizes = [2, 16], strides = [1, 1]} : vector<2x32xf32> to vector<2x16xf32>
    %315 = arith.mulf %313, %314 : vector<2x16xf32>
    %316 = vector.extract_strided_slice %310 {offsets = [0, 16], sizes = [2, 16], strides = [1, 1]} : vector<2x32xf32> to vector<2x16xf32>
    %317 = vector.extract_strided_slice %312 {offsets = [0, 16], sizes = [2, 16], strides = [1, 1]} : vector<2x32xf32> to vector<2x16xf32>
    %318 = arith.mulf %316, %317 : vector<2x16xf32>
    %cst_82 = arith.constant 0.000000e+00 : f32
    %319 = vector.broadcast %cst_82 : f32 to vector<2x32xf32>
    %320 = arith.cmpf ogt, %312, %319 : vector<2x32xf32>
    %321 = arith.select %320, %310, %289 : vector<2x32xi1>, vector<2x32xf32>
    %cst_83 = arith.constant 0.000000e+00 : f32
    %322 = vector.broadcast %cst_83 : f32 to vector<2x32xf32>
    %323 = arith.cmpf ogt, %312, %322 : vector<2x32xf32>
    %324 = arith.select %323, %308, %292 : vector<2x32xi1>, vector<2x32xf32>
    %cst_84 = arith.constant dense<0.000000e+00> : vector<2x128xf32>
    %325 = tpu.matmul %321, %226, %cst_84 {dimension_numbers = #tpu.dot_dimension_numbers<[1], [0], [0], [1], [0, 0, 1, 1], [], []>} : vector<2x32xf32>, vector<32x128xf32>, vector<2x128xf32> -> vector<2x128xf32>
    %326 = arith.addf %196, %325 : vector<2x128xf32>
    %327 = vector.extract_strided_slice %326 {offsets = [0, 0], sizes = [2, 96], strides = [1, 1]} : vector<2x128xf32> to vector<2x96xf32>
    %328 = arith.negf %327 : vector<2x96xf32>
    %329 = math.exp %328 : vector<2x96xf32>
    %cst_85 = arith.constant 1.000000e+00 : f32
    %330 = vector.broadcast %cst_85 : f32 to vector<2x96xf32>
    %331 = arith.addf %330, %329 : vector<2x96xf32>
    %332 = arith.divf %330, %331 : vector<2x96xf32>
    %333 = vector.extract_strided_slice %332 {offsets = [0, 0], sizes = [2, 32], strides = [1, 1]} : vector<2x96xf32> to vector<2x32xf32>
    %334 = vector.extract_strided_slice %332 {offsets = [0, 32], sizes = [2, 32], strides = [1, 1]} : vector<2x96xf32> to vector<2x32xf32>
    %335 = vector.extract_strided_slice %332 {offsets = [0, 64], sizes = [2, 32], strides = [1, 1]} : vector<2x96xf32> to vector<2x32xf32>
    %336 = vector.extract_strided_slice %326 {offsets = [0, 96], sizes = [2, 32], strides = [1, 1]} : vector<2x128xf32> to vector<2x32xf32>
    %337 = math.tanh %336 : vector<2x32xf32>
    %338 = arith.mulf %334, %324 : vector<2x32xf32>
    %339 = arith.mulf %333, %337 : vector<2x32xf32>
    %340 = arith.addf %338, %339 : vector<2x32xf32>
    %341 = math.tanh %340 : vector<2x32xf32>
    %342 = arith.mulf %335, %341 : vector<2x32xf32>
    %343 = vector.extract_strided_slice %225 {offsets = [3, 0, 0], sizes = [1, 2, 32], strides = [1, 1, 1]} : vector<8x2x32xf32> to vector<1x2x32xf32>
    %344 = vector.shape_cast %343 : vector<1x2x32xf32> to vector<2x32xf32>
    %345 = vector.extract_strided_slice %342 {offsets = [0, 0], sizes = [2, 16], strides = [1, 1]} : vector<2x32xf32> to vector<2x16xf32>
    %346 = vector.extract_strided_slice %344 {offsets = [0, 0], sizes = [2, 16], strides = [1, 1]} : vector<2x32xf32> to vector<2x16xf32>
    %347 = arith.mulf %345, %346 : vector<2x16xf32>
    %348 = vector.extract_strided_slice %342 {offsets = [0, 16], sizes = [2, 16], strides = [1, 1]} : vector<2x32xf32> to vector<2x16xf32>
    %349 = vector.extract_strided_slice %344 {offsets = [0, 16], sizes = [2, 16], strides = [1, 1]} : vector<2x32xf32> to vector<2x16xf32>
    %350 = arith.mulf %348, %349 : vector<2x16xf32>
    %cst_86 = arith.constant 0.000000e+00 : f32
    %351 = vector.broadcast %cst_86 : f32 to vector<2x32xf32>
    %352 = arith.cmpf ogt, %344, %351 : vector<2x32xf32>
    %353 = arith.select %352, %342, %321 : vector<2x32xi1>, vector<2x32xf32>
    %cst_87 = arith.constant 0.000000e+00 : f32
    %354 = vector.broadcast %cst_87 : f32 to vector<2x32xf32>
    %355 = arith.cmpf ogt, %344, %354 : vector<2x32xf32>
    %356 = arith.select %355, %340, %324 : vector<2x32xi1>, vector<2x32xf32>
    %cst_88 = arith.constant dense<0.000000e+00> : vector<2x128xf32>
    %357 = tpu.matmul %353, %226, %cst_88 {dimension_numbers = #tpu.dot_dimension_numbers<[1], [0], [0], [1], [0, 0, 1, 1], [], []>} : vector<2x32xf32>, vector<32x128xf32>, vector<2x128xf32> -> vector<2x128xf32>
    %358 = arith.addf %203, %357 : vector<2x128xf32>
    %359 = vector.extract_strided_slice %358 {offsets = [0, 0], sizes = [2, 96], strides = [1, 1]} : vector<2x128xf32> to vector<2x96xf32>
    %360 = arith.negf %359 : vector<2x96xf32>
    %361 = math.exp %360 : vector<2x96xf32>
    %cst_89 = arith.constant 1.000000e+00 : f32
    %362 = vector.broadcast %cst_89 : f32 to vector<2x96xf32>
    %363 = arith.addf %362, %361 : vector<2x96xf32>
    %364 = arith.divf %362, %363 : vector<2x96xf32>
    %365 = vector.extract_strided_slice %364 {offsets = [0, 0], sizes = [2, 32], strides = [1, 1]} : vector<2x96xf32> to vector<2x32xf32>
    %366 = vector.extract_strided_slice %364 {offsets = [0, 32], sizes = [2, 32], strides = [1, 1]} : vector<2x96xf32> to vector<2x32xf32>
    %367 = vector.extract_strided_slice %364 {offsets = [0, 64], sizes = [2, 32], strides = [1, 1]} : vector<2x96xf32> to vector<2x32xf32>
    %368 = vector.extract_strided_slice %358 {offsets = [0, 96], sizes = [2, 32], strides = [1, 1]} : vector<2x128xf32> to vector<2x32xf32>
    %369 = math.tanh %368 : vector<2x32xf32>
    %370 = arith.mulf %366, %356 : vector<2x32xf32>
    %371 = arith.mulf %365, %369 : vector<2x32xf32>
    %372 = arith.addf %370, %371 : vector<2x32xf32>
    %373 = math.tanh %372 : vector<2x32xf32>
    %374 = arith.mulf %367, %373 : vector<2x32xf32>
    %375 = vector.extract_strided_slice %225 {offsets = [4, 0, 0], sizes = [1, 2, 32], strides = [1, 1, 1]} : vector<8x2x32xf32> to vector<1x2x32xf32>
    %376 = vector.shape_cast %375 : vector<1x2x32xf32> to vector<2x32xf32>
    %377 = vector.extract_strided_slice %374 {offsets = [0, 0], sizes = [2, 16], strides = [1, 1]} : vector<2x32xf32> to vector<2x16xf32>
    %378 = vector.extract_strided_slice %376 {offsets = [0, 0], sizes = [2, 16], strides = [1, 1]} : vector<2x32xf32> to vector<2x16xf32>
    %379 = arith.mulf %377, %378 : vector<2x16xf32>
    %380 = vector.extract_strided_slice %374 {offsets = [0, 16], sizes = [2, 16], strides = [1, 1]} : vector<2x32xf32> to vector<2x16xf32>
    %381 = vector.extract_strided_slice %376 {offsets = [0, 16], sizes = [2, 16], strides = [1, 1]} : vector<2x32xf32> to vector<2x16xf32>
    %382 = arith.mulf %380, %381 : vector<2x16xf32>
    %cst_90 = arith.constant 0.000000e+00 : f32
    %383 = vector.broadcast %cst_90 : f32 to vector<2x32xf32>
    %384 = arith.cmpf ogt, %376, %383 : vector<2x32xf32>
    %385 = arith.select %384, %374, %353 : vector<2x32xi1>, vector<2x32xf32>
    %cst_91 = arith.constant 0.000000e+00 : f32
    %386 = vector.broadcast %cst_91 : f32 to vector<2x32xf32>
    %387 = arith.cmpf ogt, %376, %386 : vector<2x32xf32>
    %388 = arith.select %387, %372, %356 : vector<2x32xi1>, vector<2x32xf32>
    %cst_92 = arith.constant dense<0.000000e+00> : vector<2x128xf32>
    %389 = tpu.matmul %385, %226, %cst_92 {dimension_numbers = #tpu.dot_dimension_numbers<[1], [0], [0], [1], [0, 0, 1, 1], [], []>} : vector<2x32xf32>, vector<32x128xf32>, vector<2x128xf32> -> vector<2x128xf32>
    %390 = arith.addf %210, %389 : vector<2x128xf32>
    %391 = vector.extract_strided_slice %390 {offsets = [0, 0], sizes = [2, 96], strides = [1, 1]} : vector<2x128xf32> to vector<2x96xf32>
    %392 = arith.negf %391 : vector<2x96xf32>
    %393 = math.exp %392 : vector<2x96xf32>
    %cst_93 = arith.constant 1.000000e+00 : f32
    %394 = vector.broadcast %cst_93 : f32 to vector<2x96xf32>
    %395 = arith.addf %394, %393 : vector<2x96xf32>
    %396 = arith.divf %394, %395 : vector<2x96xf32>
    %397 = vector.extract_strided_slice %396 {offsets = [0, 0], sizes = [2, 32], strides = [1, 1]} : vector<2x96xf32> to vector<2x32xf32>
    %398 = vector.extract_strided_slice %396 {offsets = [0, 32], sizes = [2, 32], strides = [1, 1]} : vector<2x96xf32> to vector<2x32xf32>
    %399 = vector.extract_strided_slice %396 {offsets = [0, 64], sizes = [2, 32], strides = [1, 1]} : vector<2x96xf32> to vector<2x32xf32>
    %400 = vector.extract_strided_slice %390 {offsets = [0, 96], sizes = [2, 32], strides = [1, 1]} : vector<2x128xf32> to vector<2x32xf32>
    %401 = math.tanh %400 : vector<2x32xf32>
    %402 = arith.mulf %398, %388 : vector<2x32xf32>
    %403 = arith.mulf %397, %401 : vector<2x32xf32>
    %404 = arith.addf %402, %403 : vector<2x32xf32>
    %405 = math.tanh %404 : vector<2x32xf32>
    %406 = arith.mulf %399, %405 : vector<2x32xf32>
    %407 = vector.extract_strided_slice %225 {offsets = [5, 0, 0], sizes = [1, 2, 32], strides = [1, 1, 1]} : vector<8x2x32xf32> to vector<1x2x32xf32>
    %408 = vector.shape_cast %407 : vector<1x2x32xf32> to vector<2x32xf32>
    %409 = vector.extract_strided_slice %406 {offsets = [0, 0], sizes = [2, 16], strides = [1, 1]} : vector<2x32xf32> to vector<2x16xf32>
    %410 = vector.extract_strided_slice %408 {offsets = [0, 0], sizes = [2, 16], strides = [1, 1]} : vector<2x32xf32> to vector<2x16xf32>
    %411 = arith.mulf %409, %410 : vector<2x16xf32>
    %412 = vector.extract_strided_slice %406 {offsets = [0, 16], sizes = [2, 16], strides = [1, 1]} : vector<2x32xf32> to vector<2x16xf32>
    %413 = vector.extract_strided_slice %408 {offsets = [0, 16], sizes = [2, 16], strides = [1, 1]} : vector<2x32xf32> to vector<2x16xf32>
    %414 = arith.mulf %412, %413 : vector<2x16xf32>
    %cst_94 = arith.constant 0.000000e+00 : f32
    %415 = vector.broadcast %cst_94 : f32 to vector<2x32xf32>
    %416 = arith.cmpf ogt, %408, %415 : vector<2x32xf32>
    %417 = arith.select %416, %406, %385 : vector<2x32xi1>, vector<2x32xf32>
    %cst_95 = arith.constant 0.000000e+00 : f32
    %418 = vector.broadcast %cst_95 : f32 to vector<2x32xf32>
    %419 = arith.cmpf ogt, %408, %418 : vector<2x32xf32>
    %420 = arith.select %419, %404, %388 : vector<2x32xi1>, vector<2x32xf32>
    %cst_96 = arith.constant dense<0.000000e+00> : vector<2x128xf32>
    %421 = tpu.matmul %417, %226, %cst_96 {dimension_numbers = #tpu.dot_dimension_numbers<[1], [0], [0], [1], [0, 0, 1, 1], [], []>} : vector<2x32xf32>, vector<32x128xf32>, vector<2x128xf32> -> vector<2x128xf32>
    %422 = arith.addf %217, %421 : vector<2x128xf32>
    %423 = vector.extract_strided_slice %422 {offsets = [0, 0], sizes = [2, 96], strides = [1, 1]} : vector<2x128xf32> to vector<2x96xf32>
    %424 = arith.negf %423 : vector<2x96xf32>
    %425 = math.exp %424 : vector<2x96xf32>
    %cst_97 = arith.constant 1.000000e+00 : f32
    %426 = vector.broadcast %cst_97 : f32 to vector<2x96xf32>
    %427 = arith.addf %426, %425 : vector<2x96xf32>
    %428 = arith.divf %426, %427 : vector<2x96xf32>
    %429 = vector.extract_strided_slice %428 {offsets = [0, 0], sizes = [2, 32], strides = [1, 1]} : vector<2x96xf32> to vector<2x32xf32>
    %430 = vector.extract_strided_slice %428 {offsets = [0, 32], sizes = [2, 32], strides = [1, 1]} : vector<2x96xf32> to vector<2x32xf32>
    %431 = vector.extract_strided_slice %428 {offsets = [0, 64], sizes = [2, 32], strides = [1, 1]} : vector<2x96xf32> to vector<2x32xf32>
    %432 = vector.extract_strided_slice %422 {offsets = [0, 96], sizes = [2, 32], strides = [1, 1]} : vector<2x128xf32> to vector<2x32xf32>
    %433 = math.tanh %432 : vector<2x32xf32>
    %434 = arith.mulf %430, %420 : vector<2x32xf32>
    %435 = arith.mulf %429, %433 : vector<2x32xf32>
    %436 = arith.addf %434, %435 : vector<2x32xf32>
    %437 = math.tanh %436 : vector<2x32xf32>
    %438 = arith.mulf %431, %437 : vector<2x32xf32>
    %439 = vector.extract_strided_slice %225 {offsets = [6, 0, 0], sizes = [1, 2, 32], strides = [1, 1, 1]} : vector<8x2x32xf32> to vector<1x2x32xf32>
    %440 = vector.shape_cast %439 : vector<1x2x32xf32> to vector<2x32xf32>
    %441 = vector.extract_strided_slice %438 {offsets = [0, 0], sizes = [2, 16], strides = [1, 1]} : vector<2x32xf32> to vector<2x16xf32>
    %442 = vector.extract_strided_slice %440 {offsets = [0, 0], sizes = [2, 16], strides = [1, 1]} : vector<2x32xf32> to vector<2x16xf32>
    %443 = arith.mulf %441, %442 : vector<2x16xf32>
    %444 = vector.extract_strided_slice %438 {offsets = [0, 16], sizes = [2, 16], strides = [1, 1]} : vector<2x32xf32> to vector<2x16xf32>
    %445 = vector.extract_strided_slice %440 {offsets = [0, 16], sizes = [2, 16], strides = [1, 1]} : vector<2x32xf32> to vector<2x16xf32>
    %446 = arith.mulf %444, %445 : vector<2x16xf32>
    %cst_98 = arith.constant 0.000000e+00 : f32
    %447 = vector.broadcast %cst_98 : f32 to vector<2x32xf32>
    %448 = arith.cmpf ogt, %440, %447 : vector<2x32xf32>
    %449 = arith.select %448, %438, %417 : vector<2x32xi1>, vector<2x32xf32>
    %cst_99 = arith.constant 0.000000e+00 : f32
    %450 = vector.broadcast %cst_99 : f32 to vector<2x32xf32>
    %451 = arith.cmpf ogt, %440, %450 : vector<2x32xf32>
    %452 = arith.select %451, %436, %420 : vector<2x32xi1>, vector<2x32xf32>
    %cst_100 = arith.constant dense<0.000000e+00> : vector<2x128xf32>
    %453 = tpu.matmul %449, %226, %cst_100 {dimension_numbers = #tpu.dot_dimension_numbers<[1], [0], [0], [1], [0, 0, 1, 1], [], []>} : vector<2x32xf32>, vector<32x128xf32>, vector<2x128xf32> -> vector<2x128xf32>
    %454 = arith.addf %224, %453 : vector<2x128xf32>
    %455 = vector.extract_strided_slice %454 {offsets = [0, 0], sizes = [2, 96], strides = [1, 1]} : vector<2x128xf32> to vector<2x96xf32>
    %456 = arith.negf %455 : vector<2x96xf32>
    %457 = math.exp %456 : vector<2x96xf32>
    %cst_101 = arith.constant 1.000000e+00 : f32
    %458 = vector.broadcast %cst_101 : f32 to vector<2x96xf32>
    %459 = arith.addf %458, %457 : vector<2x96xf32>
    %460 = arith.divf %458, %459 : vector<2x96xf32>
    %461 = vector.extract_strided_slice %460 {offsets = [0, 0], sizes = [2, 32], strides = [1, 1]} : vector<2x96xf32> to vector<2x32xf32>
    %462 = vector.extract_strided_slice %460 {offsets = [0, 32], sizes = [2, 32], strides = [1, 1]} : vector<2x96xf32> to vector<2x32xf32>
    %463 = vector.extract_strided_slice %460 {offsets = [0, 64], sizes = [2, 32], strides = [1, 1]} : vector<2x96xf32> to vector<2x32xf32>
    %464 = vector.extract_strided_slice %454 {offsets = [0, 96], sizes = [2, 32], strides = [1, 1]} : vector<2x128xf32> to vector<2x32xf32>
    %465 = math.tanh %464 : vector<2x32xf32>
    %466 = arith.mulf %462, %452 : vector<2x32xf32>
    %467 = arith.mulf %461, %465 : vector<2x32xf32>
    %468 = arith.addf %466, %467 : vector<2x32xf32>
    %469 = math.tanh %468 : vector<2x32xf32>
    %470 = arith.mulf %463, %469 : vector<2x32xf32>
    %471 = vector.extract_strided_slice %225 {offsets = [7, 0, 0], sizes = [1, 2, 32], strides = [1, 1, 1]} : vector<8x2x32xf32> to vector<1x2x32xf32>
    %472 = vector.shape_cast %471 : vector<1x2x32xf32> to vector<2x32xf32>
    %473 = vector.extract_strided_slice %470 {offsets = [0, 0], sizes = [2, 16], strides = [1, 1]} : vector<2x32xf32> to vector<2x16xf32>
    %474 = vector.extract_strided_slice %472 {offsets = [0, 0], sizes = [2, 16], strides = [1, 1]} : vector<2x32xf32> to vector<2x16xf32>
    %475 = arith.mulf %473, %474 : vector<2x16xf32>
    %476 = vector.extract_strided_slice %470 {offsets = [0, 16], sizes = [2, 16], strides = [1, 1]} : vector<2x32xf32> to vector<2x16xf32>
    %477 = vector.extract_strided_slice %472 {offsets = [0, 16], sizes = [2, 16], strides = [1, 1]} : vector<2x32xf32> to vector<2x16xf32>
    %478 = arith.mulf %476, %477 : vector<2x16xf32>
    %479 = vector.shape_cast %251 : vector<2x16xf32> to vector<2x1x16xf32>
    %480 = vector.shape_cast %283 : vector<2x16xf32> to vector<2x1x16xf32>
    %481 = vector.shape_cast %315 : vector<2x16xf32> to vector<2x1x16xf32>
    %482 = vector.shape_cast %347 : vector<2x16xf32> to vector<2x1x16xf32>
    %483 = vector.shape_cast %379 : vector<2x16xf32> to vector<2x1x16xf32>
    %484 = vector.shape_cast %411 : vector<2x16xf32> to vector<2x1x16xf32>
    %485 = vector.shape_cast %443 : vector<2x16xf32> to vector<2x1x16xf32>
    %486 = vector.shape_cast %475 : vector<2x16xf32> to vector<2x1x16xf32>
    %487 = tpu.concatenate %479, %480, %481, %482, %483, %484, %485, %486 in 1 : vector<2x1x16xf32>, vector<2x1x16xf32>, vector<2x1x16xf32>, vector<2x1x16xf32>, vector<2x1x16xf32>, vector<2x1x16xf32>, vector<2x1x16xf32>, vector<2x1x16xf32> -> vector<2x8x16xf32>
    %488 = vector.shape_cast %478 : vector<2x16xf32> to vector<2x1x16xf32>
    %489 = vector.shape_cast %446 : vector<2x16xf32> to vector<2x1x16xf32>
    %490 = vector.shape_cast %414 : vector<2x16xf32> to vector<2x1x16xf32>
    %491 = vector.shape_cast %382 : vector<2x16xf32> to vector<2x1x16xf32>
    %492 = vector.shape_cast %350 : vector<2x16xf32> to vector<2x1x16xf32>
    %493 = vector.shape_cast %318 : vector<2x16xf32> to vector<2x1x16xf32>
    %494 = vector.shape_cast %286 : vector<2x16xf32> to vector<2x1x16xf32>
    %495 = vector.shape_cast %254 : vector<2x16xf32> to vector<2x1x16xf32>
    %496 = tpu.concatenate %488, %489, %490, %491, %492, %493, %494, %495 in 1 : vector<2x1x16xf32>, vector<2x1x16xf32>, vector<2x1x16xf32>, vector<2x1x16xf32>, vector<2x1x16xf32>, vector<2x1x16xf32>, vector<2x1x16xf32>, vector<2x1x16xf32> -> vector<2x8x16xf32>
    %497 = tpu.concatenate %487, %496 in 2 : vector<2x8x16xf32>, vector<2x8x16xf32> -> vector<2x8x32xf32>
    %498 = vector.shape_cast %497 : vector<2x8x32xf32> to vector<16x32xf32>
    %499 = arith.addf %498, %158 : vector<16x32xf32>
    %c0_102 = arith.constant 0 : index
    %c0_103 = arith.constant 0 : index
    %500 = vector.load %arg9[%c0_102, %c0_103] : memref<32x128xf32, #tpu.memory_space<vmem>>, vector<32x128xf32>
    %cst_104 = arith.constant dense<0.000000e+00> : vector<16x128xf32>
    %501 = tpu.matmul %499, %500, %cst_104 {dimension_numbers = #tpu.dot_dimension_numbers<[1], [0], [0], [1], [0, 0, 1, 1], [], []>} : vector<16x32xf32>, vector<32x128xf32>, vector<16x128xf32> -> vector<16x128xf32>
    %502 = vector.broadcast %11 : vector<1x128xf32> to vector<16x128xf32>
    %503 = arith.addf %501, %502 : vector<16x128xf32>
    %c0_105 = arith.constant 0 : index
    %c0_106 = arith.constant 0 : index
    %504 = vector.load %arg12[%c0_105, %c0_106] : memref<16x1xf32, #tpu.memory_space<vmem>>, vector<16x1xf32>
    %cst_107 = arith.constant 1.000000e+00 : f32
    %505 = vector.broadcast %cst_107 : f32 to vector<16x1xf32>
    %506 = arith.subf %505, %504 : vector<16x1xf32>
    %cst_108 = arith.constant -1.000000e+32 : f32
    %507 = vector.broadcast %cst_108 : f32 to vector<16x1xf32>
    %508 = arith.mulf %506, %507 : vector<16x1xf32>
    %509 = vector.broadcast %508 : vector<16x1xf32> to vector<16x128xf32>
    %510 = arith.addf %503, %509 : vector<16x128xf32>
    %511 = tpu.iota {dimensions = array<i32: 1>} : vector<16x128xi32>
    %c8_i32 = arith.constant 8 : i32
    %512 = vector.broadcast %c8_i32 : i32 to vector<16x128xi32>
    %513 = arith.cmpi slt, %511, %512 : vector<16x128xi32>
    %cst_109 = arith.constant -3.000000e+38 : f32
    %514 = vector.broadcast %cst_109 : f32 to vector<16x128xf32>
    %515 = arith.select %513, %510, %514 : vector<16x128xi1>, vector<16x128xf32>
    %cst_110 = arith.constant dense<0xFF800000> : vector<16xf32>
    %516 = vector.multi_reduction <maximumf>, %515, %cst_110 [1] : vector<16x128xf32> to vector<16xf32>
    %517 = vector.shape_cast %516 : vector<16xf32> to vector<16x1xf32>
    %518 = vector.broadcast %517 : vector<16x1xf32> to vector<16x128xf32>
    %519 = arith.subf %515, %518 : vector<16x128xf32>
    %520 = math.exp %519 : vector<16x128xf32>
    %cst_111 = arith.constant dense<0.000000e+00> : vector<16xf32>
    %521 = vector.multi_reduction <add>, %520, %cst_111 [1] : vector<16x128xf32> to vector<16xf32>
    %522 = vector.shape_cast %521 : vector<16xf32> to vector<16x1xf32>
    %523 = vector.broadcast %522 : vector<16x1xf32> to vector<16x128xf32>
    %524 = arith.divf %520, %523 : vector<16x128xf32>
    %c0_112 = arith.constant 0 : index
    %c0_113 = arith.constant 0 : index
    %525 = vector.load %arg14[%c0_112, %c0_113] : memref<16x128xf32, #tpu.memory_space<vmem>>, vector<16x128xf32>
    tpu.vector_store %arg14[%c0_112, %c0_113], %524 {strides = array<i32>} : memref<16x128xf32, #tpu.memory_space<vmem>>, vector<16x128xf32>,
    %526 = vector.broadcast %517 : vector<16x1xf32> to vector<16x128xf32>
    %527 = arith.subf %515, %526 : vector<16x128xf32>
    %528 = math.log %522 : vector<16x1xf32>
    %529 = vector.broadcast %528 : vector<16x1xf32> to vector<16x128xf32>
    %530 = arith.subf %527, %529 : vector<16x128xf32>
    %c0_114 = arith.constant 0 : index
    %c0_115 = arith.constant 0 : index
    %531 = vector.load %arg13[%c0_114, %c0_115] : memref<16x1xi32, #tpu.memory_space<vmem>>, vector<16x1xi32>
    %532 = vector.broadcast %531 : vector<16x1xi32> to vector<16x128xi32>
    %533 = arith.cmpi eq, %511, %532 : vector<16x128xi32>
    %534 = arith.extui %533 : vector<16x128xi1> to vector<16x128xi32>
    %535 = arith.sitofp %534 : vector<16x128xi32> to vector<16x128xf32>
    %536 = arith.mulf %535, %530 : vector<16x128xf32>
    %cst_116 = arith.constant dense<0.000000e+00> : vector<16xf32>
    %537 = vector.multi_reduction <add>, %536, %cst_116 [1] : vector<16x128xf32> to vector<16xf32>
    %538 = vector.shape_cast %537 : vector<16xf32> to vector<16x1xf32>
    %cst_117 = arith.constant 0.000000e+00 : f32
    %539 = vector.broadcast %cst_117 : f32 to vector<16x1xf32>
    %540 = arith.subf %539, %538 : vector<16x1xf32>
    %c0_i32 = arith.constant 0 : i32
    %541 = vector.broadcast %c0_i32 : i32 to vector<16x1xi32>
    %542 = arith.cmpi ne, %531, %541 : vector<16x1xi32>
    %543 = arith.extui %542 : vector<16x1xi1> to vector<16x1xi32>
    %544 = arith.sitofp %543 : vector<16x1xi32> to vector<16x1xf32>
    %545 = arith.mulf %540, %544 : vector<16x1xf32>
    %cst_118 = arith.constant dense<0.000000e+00> : vector<1xf32>
    %546 = vector.multi_reduction <add>, %545, %cst_118 [0] : vector<16x1xf32> to vector<1xf32>
    %547 = vector.shape_cast %546 : vector<1xf32> to vector<1x1xf32>
    %cst_119 = arith.constant dense<0.000000e+00> : vector<1xf32>
    %548 = vector.multi_reduction <add>, %544, %cst_119 [0] : vector<16x1xf32> to vector<1xf32>
    %549 = vector.shape_cast %548 : vector<1xf32> to vector<1x1xf32>
    %cst_120 = arith.constant 1.000000e+00 : f32
    %550 = vector.broadcast %cst_120 : f32 to vector<1x1xf32>
    %551 = arith.maximumf %549, %550 : vector<1x1xf32>
    %552 = arith.divf %547, %551 : vector<1x1xf32>
    %c0_121 = arith.constant 0 : index
    %c0_122 = arith.constant 0 : index
    %553 = vector.load %arg15[%c0_121, %c0_122] : memref<1x1xf32, #tpu.memory_space<vmem>>, vector<1x1xf32>
    tpu.vector_store %arg15[%c0_121, %c0_122], %552 {strides = array<i32>} : memref<1x1xf32, #tpu.memory_space<vmem>>, vector<1x1xf32>,
    return
  }
}

</mosaic_0001>

<llo_original>
// kernel: slu_tagging_forward.1
$region0: #{slu_tagging_forward.1}
  #allocation0 [shape = 'u32[]', space=smem, size = 0x4, offset = 0x4, fixed_abs, tag = 'smem constant byte address 0x4 - core index']
  #allocation1 [shape = 'u32[72,128]{1,0:T(1,128)}', space=vmem, size = 0x9000, scoped, tag = 'internal scratch']
  %s0 = inlined_call_operand.vmem [shape: f32[16,32], index: 0, kind: input, shape index: {}]
  %s1 = inlined_call_operand.vmem [shape: f32[32,32], index: 1, kind: input, shape index: {}]
  %s2 = inlined_call_operand.vmem [shape: f32[32,32], index: 2, kind: input, shape index: {}]
  %s3 = inlined_call_operand.vmem [shape: f32[32,32], index: 3, kind: input, shape index: {}]
  %s4 = inlined_call_operand.vmem [shape: f32[32,32], index: 4, kind: input, shape index: {}]
  %s5 = inlined_call_operand.vmem [shape: f32[32,128], index: 5, kind: input, shape index: {}]
  %s6 = inlined_call_operand.vmem [shape: f32[128,32], index: 6, kind: input, shape index: {}]
  %s7 = inlined_call_operand.vmem [shape: f32[32,128], index: 7, kind: input, shape index: {}]
  %s8 = inlined_call_operand.vmem [shape: f32[32,128], index: 8, kind: input, shape index: {}]
  %s9 = inlined_call_operand.vmem [shape: f32[32,128], index: 9, kind: input, shape index: {}]
  %s10 = inlined_call_operand.vmem [shape: f32[12,128], index: 10, kind: input, shape index: {}]
  %s11 = inlined_call_operand.vmem [shape: f32[8,2,32], index: 11, kind: input, shape index: {}]
  %s12 = inlined_call_operand.vmem [shape: f32[16,1], index: 12, kind: input, shape index: {}]
  %s13 = inlined_call_operand.vmem [shape: s32[16,1], index: 13, kind: input, shape index: {}]
  %s14 = inlined_call_operand.vmem [shape: f32[16,128], index: 14, kind: output, shape index: {0}]
  %s15 = inlined_call_operand.hbm [shape: f32[1,1], index: 15, kind: output, shape index: {1}]
  %16 = xla_tuple %s14, %s15
  %s17 = sld [smem:[#allocation0]]
  $region74: #{slu_tagging_forward.1} parent=0
    _
  %s19 = ssub.s32 1, %s17
  %s20 = scalar_select 0, %s19, %s17
  $region1: #{slu_tagging_forward.1} parent=0
    #allocation2 [shape = 'u8[512]{0}', space=vmem, size = 0x400, scoped, tag = 'output window, operand 1, single buffered']
    #allocation3 [shape = 's32[1]{0}', space=sflag, size = 0x4, scoped, tag = 'scoped memory for slu_tagging_forward.1']
    %21 = vsyncpa [#allocation3], 0
    // Predicated region
    $region2: #{slu_tagging_forward.1} parent=1 // pred_check
      _
    $region3: #{slu_tagging_forward.1} parent=1 // pred_check_branch
      %23 = sbr.rel (0) target = $region5
    $region4: #{slu_tagging_forward.1} parent=1 // pred_region
      _
    $region5: #{slu_tagging_forward.1} parent=1 // pred_fallthru
      _
    // Predicated region
    $region6: #{slu_tagging_forward.1} parent=1 // pred_check
      _
    $region7: #{slu_tagging_forward.1} parent=1 // pred_check_branch
      %25 = sbr.rel (0) target = $region9
    $region8: #{slu_tagging_forward.1} parent=1 // pred_region
      _
    $region9: #{slu_tagging_forward.1} parent=1 // pred_fallthru
      _
    // Predicated region
    $region10: #{slu_tagging_forward.1} parent=1 // pred_check
      _
    $region11: #{slu_tagging_forward.1} parent=1 // pred_check_branch
      %27 = sbr.rel (0) target = $region13
    $region12: #{slu_tagging_forward.1} parent=1 // pred_region
      _
    $region13: #{slu_tagging_forward.1} parent=1 // pred_fallthru
      _
    // Predicated region
    $region14: #{slu_tagging_forward.1} parent=1 // pred_check
      _
    $region15: #{slu_tagging_forward.1} parent=1 // pred_check_branch
      %29 = sbr.rel (0) target = $region17
    $region16: #{slu_tagging_forward.1} parent=1 // pred_region
      _
    $region17: #{slu_tagging_forward.1} parent=1 // pred_fallthru
      _
    // Predicated region
    $region18: #{slu_tagging_forward.1} parent=1 // pred_check
      _
    $region19: #{slu_tagging_forward.1} parent=1 // pred_check_branch
      %31 = sbr.rel (0) target = $region21
    $region20: #{slu_tagging_forward.1} parent=1 // pred_region
      _
    $region21: #{slu_tagging_forward.1} parent=1 // pred_fallthru
      _
    // Predicated region
    $region22: #{slu_tagging_forward.1} parent=1 // pred_check
      _
    $region23: #{slu_tagging_forward.1} parent=1 // pred_check_branch
      %33 = sbr.rel (0) target = $region25
    $region24: #{slu_tagging_forward.1} parent=1 // pred_region
      _
    $region25: #{slu_tagging_forward.1} parent=1 // pred_fallthru
      _
    // Predicated region
    $region26: #{slu_tagging_forward.1} parent=1 // pred_check
      _
    $region27: #{slu_tagging_forward.1} parent=1 // pred_check_branch
      %35 = sbr.rel (0) target = $region29
    $region28: #{slu_tagging_forward.1} parent=1 // pred_region
      _
    $region29: #{slu_tagging_forward.1} parent=1 // pred_fallthru
      _
    // Predicated region
    $region30: #{slu_tagging_forward.1} parent=1 // pred_check
      _
    $region31: #{slu_tagging_forward.1} parent=1 // pred_check_branch
      %37 = sbr.rel (0) target = $region33
    $region32: #{slu_tagging_forward.1} parent=1 // pred_region
      _
    $region33: #{slu_tagging_forward.1} parent=1 // pred_fallthru
      _
    // Predicated region
    $region34: #{slu_tagging_forward.1} parent=1 // pred_check
      _
    $region35: #{slu_tagging_forward.1} parent=1 // pred_check_branch
      %39 = sbr.rel (0) target = $region37
    $region36: #{slu_tagging_forward.1} parent=1 // pred_region
      _
    $region37: #{slu_tagging_forward.1} parent=1 // pred_fallthru
      _
    // Predicated region
    $region38: #{slu_tagging_forward.1} parent=1 // pred_check
      _
    $region39: #{slu_tagging_forward.1} parent=1 // pred_check_branch
      %41 = sbr.rel (0) target = $region41
    $region40: #{slu_tagging_forward.1} parent=1 // pred_region
      _
    $region41: #{slu_tagging_forward.1} parent=1 // pred_fallthru
      _
    // Predicated region
    $region42: #{slu_tagging_forward.1} parent=1 // pred_check
      _
    $region43: #{slu_tagging_forward.1} parent=1 // pred_check_branch
      %43 = sbr.rel (0) target = $region45
    $region44: #{slu_tagging_forward.1} parent=1 // pred_region
      _
    $region45: #{slu_tagging_forward.1} parent=1 // pred_fallthru
      _
    // Predicated region
    $region46: #{slu_tagging_forward.1} parent=1 // pred_check
      _
    $region47: #{slu_tagging_forward.1} parent=1 // pred_check_branch
      %45 = sbr.rel (0) target = $region49
    $region48: #{slu_tagging_forward.1} parent=1 // pred_region
      _
    $region49: #{slu_tagging_forward.1} parent=1 // pred_fallthru
      _
    // Predicated region
    $region50: #{slu_tagging_forward.1} parent=1 // pred_check
      _
    $region51: #{slu_tagging_forward.1} parent=1 // pred_check_branch
      %47 = sbr.rel (0) target = $region53
    $region52: #{slu_tagging_forward.1} parent=1 // pred_region
      _
    $region53: #{slu_tagging_forward.1} parent=1 // pred_fallthru
      _
    // Predicated region
    $region54: #{slu_tagging_forward.1} parent=1 // pred_check
      _
    $region55: #{slu_tagging_forward.1} parent=1 // pred_check_branch
      %49 = sbr.rel (0) target = $region57
    $region56: #{slu_tagging_forward.1} parent=1 // pred_region
      _
    $region57: #{slu_tagging_forward.1} parent=1 // pred_fallthru
      _
    %v50 = vld [vmem:[%s10] sm:$0x1]
    %v51 = vld [vmem:[%s10 + $0x1] sm:$0x1]
    %v52 = vld [vmem:[%s10 + $0x2] sm:$0x1]
    %v53 = vld [vmem:[%s10 + $0x3] sm:$0x1]
    %v54 = vld [vmem:[%s10 + $0x4] sm:$0x1]
    %v55 = vld [vmem:[%s10 + $0x5] sm:$0x1]
    %v56 = vld [vmem:[%s10 + $0x6] sm:$0x1]
    %v57 = vld [vmem:[%s10 + $0x7] sm:$0x1]
    %v58 = vld [vmem:[%s10 + $0x8] sm:$0x1]
    %v59 = vld [vmem:[%s10 + $0x9] sm:$0x1]
    %v60 = vld [vmem:[%s10 + $0xa] sm:$0x1]
    %v61 = vld [vmem:[%s10 + $0xb] sm:$0x1]
    %v62 = vld [vmem:[%s0] sm:$0xff]
    %v63 = vld [vmem:[%s0 + $0x8] sm:$0xff]
    %v64 = vld [vmem:[%s1] sm:$0xff]
    %v65 = vld [vmem:[%s1 + $0x8] sm:$0xff]
    %v66 = vld [vmem:[%s1 + $0x10] sm:$0xff]
    %v67 = vld [vmem:[%s1 + $0x18] sm:$0xff]
    %v68 = vperm.slane %v50, 0
    %vm69 = vcmask 261120
    %v71 = vsel %vm69, %v62, 0
    %v74 = vsel %vm69, %v63, 0
    %76 = vmatpush.msra.mxu0 0.0
    %77 = vmatpush.msra.mxu0 0.0
    %78 = vmatpush.msra.mxu0 0.0
    %79 = vmatpush.msra.mxu0 0.0
    %80 = vmatpush.msra.mxu0 0.0
    %81 = vmatpush.msra.mxu0 0.0
    %82 = vmatpush.msra.mxu0 0.0
    %83 = vmatpush.msra.mxu0 0.0
    %84 = vmatpush.msra.mxu0 0.0
    %85 = vmatpush.msra.mxu0 0.0
    %86 = vmatpush.msra.mxu0 0.0
    %87 = vmatpush.msra.mxu0 0.0
    %88 = vmatpush.msra.mxu0 %v67
    %89 = vmatpush.msra.mxu0 %v66
    %90 = vmatpush.msra.mxu0 %v65
    %91 = vmatpush.msra.mxu0 %v64
    %92 = vmatmul.f32.gmra.mxu0 %v71
    %v93 = vpop.f32.mrf.mxu0
    %v94 = vadd.f32 %v68, %v93
    %95 = vmatmul.f32.gmra.mxu0 %v74
    %v96 = vpop.f32.mrf.mxu0
    %v97 = vadd.f32 %v68, %v96
    %98 = vdwg.mxu0
    %v99 = vld [vmem:[%s2] sm:$0xff]
    %v100 = vld [vmem:[%s2 + $0x8] sm:$0xff]
    %v101 = vld [vmem:[%s2 + $0x10] sm:$0xff]
    %v102 = vld [vmem:[%s2 + $0x18] sm:$0xff]
    %v103 = vperm.slane %v51, 0
    %104 = vmatpush.msra.mxu0 0.0
    %105 = vmatpush.msra.mxu0 0.0
    %106 = vmatpush.msra.mxu0 0.0
    %107 = vmatpush.msra.mxu0 0.0
    %108 = vmatpush.msra.mxu0 0.0
    %109 = vmatpush.msra.mxu0 0.0
    %110 = vmatpush.msra.mxu0 0.0
    %111 = vmatpush.msra.mxu0 0.0
    %112 = vmatpush.msra.mxu0 0.0
    %113 = vmatpush.msra.mxu0 0.0
    %114 = vmatpush.msra.mxu0 0.0
    %115 = vmatpush.msra.mxu0 0.0
    %116 = vmatpush.msra.mxu0 %v102
    %117 = vmatpush.msra.mxu0 %v101
    %118 = vmatpush.msra.mxu0 %v100
    %119 = vmatpush.msra.mxu0 %v99
    %120 = vmatmul.f32.gmra.mxu0 %v71
    %v121 = vpop.f32.mrf.mxu0
    %v122 = vadd.f32 %v103, %v121
    %123 = vmatmul.f32.gmra.mxu0 %v74
    %v124 = vpop.f32.mrf.mxu0
    %v125 = vadd.f32 %v103, %v124
    %126 = vdwg.mxu0
    %v127 = vld [vmem:[%s3] sm:$0xff]
    %v128 = vld [vmem:[%s3 + $0x8] sm:$0xff]
    %v129 = vld [vmem:[%s3 + $0x10] sm:$0xff]
    %v130 = vld [vmem:[%s3 + $0x18] sm:$0xff]
    %v131 = vperm.slane %v52, 0
    %132 = vmatpush.msra.mxu0 0.0
    %133 = vmatpush.msra.mxu0 0.0
    %134 = vmatpush.msra.mxu0 0.0
    %135 = vmatpush.msra.mxu0 0.0
    %136 = vmatpush.msra.mxu0 0.0
    %137 = vmatpush.msra.mxu0 0.0
    %138 = vmatpush.msra.mxu0 0.0
    %139 = vmatpush.msra.mxu0 0.0
    %140 = vmatpush.msra.mxu0 0.0
    %141 = vmatpush.msra.mxu0 0.0
    %142 = vmatpush.msra.mxu0 0.0
    %143 = vmatpush.msra.mxu0 0.0
    %144 = vmatpush.msra.mxu0 %v130
    %145 = vmatpush.msra.mxu0 %v129
    %146 = vmatpush.msra.mxu0 %v128
    %147 = vmatpush.msra.mxu0 %v127
    %148 = vmatmul.f32.gmra.mxu0 %v71
    %v149 = vpop.f32.mrf.mxu0
    %v150 = vadd.f32 %v131, %v149
    %151 = vmatmul.f32.gmra.mxu0 %v74
    %v152 = vpop.f32.mrf.mxu0
    %v153 = vadd.f32 %v131, %v152
    %154 = vdwg.mxu0
    %vm155 = vcmask 64512
    %v157 = vsel %vm155, %v94, 0
    %v160 = vsel %vm155, %v122, 0
    %162 = vmatpush.xpose.msra.mxu0 0.0
    %163 = vmatpush.xpose.msra.mxu0 0.0
    %164 = vmatpush.xpose.msra.mxu0 0.0
    %165 = vmatpush.xpose.msra.mxu0 0.0
    %166 = vmatpush.xpose.msra.mxu0 0.0
    %167 = vmatpush.xpose.msra.mxu0 0.0
    %168 = vmatpush.xpose.msra.mxu0 0.0
    %169 = vmatpush.xpose.msra.mxu0 0.0
    %170 = vmatpush.xpose.msra.mxu0 0.0
    %171 = vmatpush.xpose.msra.mxu0 0.0
    %172 = vmatpush.xpose.msra.mxu0 0.0
    %173 = vmatpush.xpose.msra.mxu0 0.0
    %174 = vmatpush.xpose.msra.mxu0 0.0
    %175 = vmatpush.xpose.msra.mxu0 0.0
    %176 = vmatpush.xpose.msra.mxu0 0.0
    %177 = vmatpush.xpose.msra.mxu0 %v160
    %178 = vmatmul.f32.gmra.mxu0 %v157
    %v179 = vpop.f32.mrf.mxu0
    %v180 = vadd.f32 0.0, %v179
    %181 = vdwg.mxu0
    %v183 = vsel %vm155, %v97, 0
    %v186 = vsel %vm155, %v125, 0
    %188 = vmatpush.xpose.msra.mxu0 0.0
    %189 = vmatpush.xpose.msra.mxu0 0.0
    %190 = vmatpush.xpose.msra.mxu0 0.0
    %191 = vmatpush.xpose.msra.mxu0 0.0
    %192 = vmatpush.xpose.msra.mxu0 0.0
    %193 = vmatpush.xpose.msra.mxu0 0.0
    %194 = vmatpush.xpose.msra.mxu0 0.0
    %195 = vmatpush.xpose.msra.mxu0 0.0
    %196 = vmatpush.xpose.msra.mxu0 0.0
    %197 = vmatpush.xpose.msra.mxu0 0.0
    %198 = vmatpush.xpose.msra.mxu0 0.0
    %199 = vmatpush.xpose.msra.mxu0 0.0
    %200 = vmatpush.xpose.msra.mxu0 0.0
    %201 = vmatpush.xpose.msra.mxu0 0.0
    %202 = vmatpush.xpose.msra.mxu0 0.0
    %203 = vmatpush.xpose.msra.mxu0 %v186
    %204 = vmatmul.f32.gmra.mxu0 %v183
    %v205 = vpop.f32.mrf.mxu0
    %v206 = vadd.f32 0.0, %v205
    %207 = vdwg.mxu0
    %v208 = vmul.f32 %v180, 0.35355338
    %v209 = vmul.f32 %v206, 0.35355338
    %v210 = vsel %vm155, %v208, -inf
    %211 = vmax.xlane.f32.xlu0 %v210
    %v212 = vpop.xlane.xlu0 %211
    %v213 = vsel %vm155, %v209, -inf
    %214 = vmax.xlane.f32.xlu0 %v213
    %v215 = vpop.xlane.xlu0 %214
    %v216 = vsub.f32 %v208, %v212
    %v217 = vsub.f32 %v209, %v215
    %v218 = vmul.f32 %v216, 1.442695
    %v219 = vpow.pop %v218
    %v220 = vmul.f32 %v217, 1.442695
    %v221 = vpow.pop %v220
    %v222 = vsel %vm155, %v219, 0.0
    %223 = vadd.xlane.f32.xlu0 %v222
    %v224 = vpop.xlane.xlu0 %223
    %v225 = vsel %vm155, %v221, 0.0
    %226 = vadd.xlane.f32.xlu0 %v225
    %v227 = vpop.xlane.xlu0 %226
    %v228 = vrcp.pop %v224
    %v229 = vrcp.pop %v227
    %v230 = vmul.f32 %v219, %v228
    %v231 = vmul.f32 %v221, %v229
    %v233 = vsel %vm155, %v230, 0
    %235 = vmatpush.msra.mxu0 0.0
    %236 = vmatpush.msra.mxu0 0.0
    %237 = vmatpush.msra.mxu0 0.0
    %238 = vmatpush.msra.mxu0 0.0
    %239 = vmatpush.msra.mxu0 0.0
    %240 = vmatpush.msra.mxu0 0.0
    %241 = vmatpush.msra.mxu0 0.0
    %242 = vmatpush.msra.mxu0 0.0
    %243 = vmatpush.msra.mxu0 0.0
    %244 = vmatpush.msra.mxu0 0.0
    %245 = vmatpush.msra.mxu0 0.0
    %246 = vmatpush.msra.mxu0 0.0
    %247 = vmatpush.msra.mxu0 0.0
    %248 = vmatpush.msra.mxu0 0.0
    %249 = vmatpush.msra.mxu0 0.0
    %250 = vmatpush.msra.mxu0 %v150
    %251 = vmatmul.f32.gmra.mxu0 %v233
    %v252 = vpop.f32.mrf.mxu0
    %v253 = vadd.f32 0.0, %v252
    %254 = vdwg.mxu0
    %v256 = vsel %vm155, %v231, 0
    %258 = vmatpush.msra.mxu0 0.0
    %259 = vmatpush.msra.mxu0 0.0
    %260 = vmatpush.msra.mxu0 0.0
    %261 = vmatpush.msra.mxu0 0.0
    %262 = vmatpush.msra.mxu0 0.0
    %263 = vmatpush.msra.mxu0 0.0
    %264 = vmatpush.msra.mxu0 0.0
    %265 = vmatpush.msra.mxu0 0.0
    %266 = vmatpush.msra.mxu0 0.0
    %267 = vmatpush.msra.mxu0 0.0
    %268 = vmatpush.msra.mxu0 0.0
    %269 = vmatpush.msra.mxu0 0.0
    %270 = vmatpush.msra.mxu0 0.0
    %271 = vmatpush.msra.mxu0 0.0
    %272 = vmatpush.msra.mxu0 0.0
    %273 = vmatpush.msra.mxu0 %v153
    %274 = vmatmul.f32.gmra.mxu0 %v256
    %v275 = vpop.f32.mrf.mxu0
    %v276 = vadd.f32 0.0, %v275
    %277 = vdwg.mxu0
    %278 = vrot.lane.b32.xlu0 %v94, 120
    %v279 = vpop.permute.xlu0 %278
    %280 = vrot.lane.b32.xlu0 %v122, 120
    %v281 = vpop.permute.xlu0 %280
    %v282 = vsel %vm155, %v279, 0
    %v284 = vsel %vm155, %v281, 0
    %286 = vmatpush.xpose.msra.mxu0 0.0
    %287 = vmatpush.xpose.msra.mxu0 0.0
    %288 = vmatpush.xpose.msra.mxu0 0.0
    %289 = vmatpush.xpose.msra.mxu0 0.0
    %290 = vmatpush.xpose.msra.mxu0 0.0
    %291 = vmatpush.xpose.msra.mxu0 0.0
    %292 = vmatpush.xpose.msra.mxu0 0.0
    %293 = vmatpush.xpose.msra.mxu0 0.0
    %294 = vmatpush.xpose.msra.mxu0 0.0
    %295 = vmatpush.xpose.msra.mxu0 0.0
    %296 = vmatpush.xpose.msra.mxu0 0.0
    %297 = vmatpush.xpose.msra.mxu0 0.0
    %298 = vmatpush.xpose.msra.mxu0 0.0
    %299 = vmatpush.xpose.msra.mxu0 0.0
    %300 = vmatpush.xpose.msra.mxu0 0.0
    %301 = vmatpush.xpose.msra.mxu0 %v284
    %302 = vmatmul.f32.gmra.mxu0 %v282
    %v303 = vpop.f32.mrf.mxu0
    %v304 = vadd.f32 0.0, %v303
    %305 = vdwg.mxu0
    %306 = vrot.lane.b32.xlu0 %v97, 120
    %v307 = vpop.permute.xlu0 %306
    %308 = vrot.lane.b32.xlu0 %v125, 120
    %v309 = vpop.permute.xlu0 %308
    %v310 = vsel %vm155, %v307, 0
    %v312 = vsel %vm155, %v309, 0
    %314 = vmatpush.xpose.msra.mxu0 0.0
    %315 = vmatpush.xpose.msra.mxu0 0.0
    %316 = vmatpush.xpose.msra.mxu0 0.0
    %317 = vmatpush.xpose.msra.mxu0 0.0
    %318 = vmatpush.xpose.msra.mxu0 0.0
    %319 = vmatpush.xpose.msra.mxu0 0.0
    %320 = vmatpush.xpose.msra.mxu0 0.0
    %321 = vmatpush.xpose.msra.mxu0 0.0
    %322 = vmatpush.xpose.msra.mxu0 0.0
    %323 = vmatpush.xpose.msra.mxu0 0.0
    %324 = vmatpush.xpose.msra.mxu0 0.0
    %325 = vmatpush.xpose.msra.mxu0 0.0
    %326 = vmatpush.xpose.msra.mxu0 0.0
    %327 = vmatpush.xpose.msra.mxu0 0.0
    %328 = vmatpush.xpose.msra.mxu0 0.0
    %329 = vmatpush.xpose.msra.mxu0 %v312
    %330 = vmatmul.f32.gmra.mxu0 %v310
    %v331 = vpop.f32.mrf.mxu0
    %v332 = vadd.f32 0.0, %v331
    %333 = vdwg.mxu0
    %v334 = vmul.f32 %v304, 0.35355338
    %v335 = vmul.f32 %v332, 0.35355338
    %v336 = vsel %vm155, %v334, -inf
    %337 = vmax.xlane.f32.xlu0 %v336
    %v338 = vpop.xlane.xlu0 %337
    %v339 = vsel %vm155, %v335, -inf
    %340 = vmax.xlane.f32.xlu0 %v339
    %v341 = vpop.xlane.xlu0 %340
    %v342 = vsub.f32 %v334, %v338
    %v343 = vsub.f32 %v335, %v341
    %v344 = vmul.f32 %v342, 1.442695
    %v345 = vpow.pop %v344
    %v346 = vmul.f32 %v343, 1.442695
    %v347 = vpow.pop %v346
    %v348 = vsel %vm155, %v345, 0.0
    %349 = vadd.xlane.f32.xlu0 %v348
    %v350 = vpop.xlane.xlu0 %349
    %v351 = vsel %vm155, %v347, 0.0
    %352 = vadd.xlane.f32.xlu0 %v351
    %v353 = vpop.xlane.xlu0 %352
    %v354 = vrcp.pop %v350
    %v355 = vrcp.pop %v353
    %v356 = vmul.f32 %v345, %v354
    %v357 = vmul.f32 %v347, %v355
    %359 = vrot.lane.b32.xlu0 %v150, 120
    %v360 = vpop.permute.xlu0 %359
    %v363 = vsel %vm155, %v356, 0
    %365 = vmatpush.msra.mxu0 0.0
    %366 = vmatpush.msra.mxu0 0.0
    %367 = vmatpush.msra.mxu0 0.0
    %368 = vmatpush.msra.mxu0 0.0
    %369 = vmatpush.msra.mxu0 0.0
    %370 = vmatpush.msra.mxu0 0.0
    %371 = vmatpush.msra.mxu0 0.0
    %372 = vmatpush.msra.mxu0 0.0
    %373 = vmatpush.msra.mxu0 0.0
    %374 = vmatpush.msra.mxu0 0.0
    %375 = vmatpush.msra.mxu0 0.0
    %376 = vmatpush.msra.mxu0 0.0
    %377 = vmatpush.msra.mxu0 0.0
    %378 = vmatpush.msra.mxu0 0.0
    %379 = vmatpush.msra.mxu0 0.0
    %380 = vmatpush.msra.mxu0 %v360
    %381 = vmatmul.f32.gmra.mxu0 %v363
    %v382 = vpop.f32.mrf.mxu0
    %v383 = vadd.f32 0.0, %v382
    %384 = vdwg.mxu0
    %386 = vrot.lane.b32.xlu0 %v153, 120
    %v387 = vpop.permute.xlu0 %386
    %v390 = vsel %vm155, %v357, 0
    %392 = vmatpush.msra.mxu0 0.0
    %393 = vmatpush.msra.mxu0 0.0
    %394 = vmatpush.msra.mxu0 0.0
    %395 = vmatpush.msra.mxu0 0.0
    %396 = vmatpush.msra.mxu0 0.0
    %397 = vmatpush.msra.mxu0 0.0
    %398 = vmatpush.msra.mxu0 0.0
    %399 = vmatpush.msra.mxu0 0.0
    %400 = vmatpush.msra.mxu0 0.0
    %401 = vmatpush.msra.mxu0 0.0
    %402 = vmatpush.msra.mxu0 0.0
    %403 = vmatpush.msra.mxu0 0.0
    %404 = vmatpush.msra.mxu0 0.0
    %405 = vmatpush.msra.mxu0 0.0
    %406 = vmatpush.msra.mxu0 0.0
    %407 = vmatpush.msra.mxu0 %v387
    %408 = vmatmul.f32.gmra.mxu0 %v390
    %v409 = vpop.f32.mrf.mxu0
    %v410 = vadd.f32 0.0, %v409
    %411 = vdwg.mxu0
    %412 = vrot.lane.b32.xlu0 %v94, 112
    %v413 = vpop.permute.xlu0 %412
    %414 = vrot.lane.b32.xlu0 %v122, 112
    %v415 = vpop.permute.xlu0 %414
    %v416 = vsel %vm155, %v413, 0
    %v418 = vsel %vm155, %v415, 0
    %420 = vmatpush.xpose.msra.mxu0 0.0
    %421 = vmatpush.xpose.msra.mxu0 0.0
    %422 = vmatpush.xpose.msra.mxu0 0.0
    %423 = vmatpush.xpose.msra.mxu0 0.0
    %424 = vmatpush.xpose.msra.mxu0 0.0
    %425 = vmatpush.xpose.msra.mxu0 0.0
    %426 = vmatpush.xpose.msra.mxu0 0.0
    %427 = vmatpush.xpose.msra.mxu0 0.0
    %428 = vmatpush.xpose.msra.mxu0 0.0
    %429 = vmatpush.xpose.msra.mxu0 0.0
    %430 = vmatpush.xpose.msra.mxu0 0.0
    %431 = vmatpush.xpose.msra.mxu0 0.0
    %432 = vmatpush.xpose.msra.mxu0 0.0
    %433 = vmatpush.xpose.msra.mxu0 0.0
    %434 = vmatpush.xpose.msra.mxu0 0.0
    %435 = vmatpush.xpose.msra.mxu0 %v418
    %436 = vmatmul.f32.gmra.mxu0 %v416
    %v437 = vpop.f32.mrf.mxu0
    %v438 = vadd.f32 0.0, %v437
    %439 = vdwg.mxu0
    %440 = vrot.lane.b32.xlu0 %v97, 112
    %v441 = vpop.permute.xlu0 %440
    %442 = vrot.lane.b32.xlu0 %v125, 112
    %v443 = vpop.permute.xlu0 %442
    %v444 = vsel %vm155, %v441, 0
    %v446 = vsel %vm155, %v443, 0
    %448 = vmatpush.xpose.msra.mxu0 0.0
    %449 = vmatpush.xpose.msra.mxu0 0.0
    %450 = vmatpush.xpose.msra.mxu0 0.0
    %451 = vmatpush.xpose.msra.mxu0 0.0
    %452 = vmatpush.xpose.msra.mxu0 0.0
    %453 = vmatpush.xpose.msra.mxu0 0.0
    %454 = vmatpush.xpose.msra.mxu0 0.0
    %455 = vmatpush.xpose.msra.mxu0 0.0
    %456 = vmatpush.xpose.msra.mxu0 0.0
    %457 = vmatpush.xpose.msra.mxu0 0.0
    %458 = vmatpush.xpose.msra.mxu0 0.0
    %459 = vmatpush.xpose.msra.mxu0 0.0
    %460 = vmatpush.xpose.msra.mxu0 0.0
    %461 = vmatpush.xpose.msra.mxu0 0.0
    %462 = vmatpush.xpose.msra.mxu0 0.0
    %463 = vmatpush.xpose.msra.mxu0 %v446
    %464 = vmatmul.f32.gmra.mxu0 %v444
    %v465 = vpop.f32.mrf.mxu0
    %v466 = vadd.f32 0.0, %v465
    %467 = vdwg.mxu0
    %v468 = vmul.f32 %v438, 0.35355338
    %v469 = vmul.f32 %v466, 0.35355338
    %v470 = vsel %vm155, %v468, -inf
    %471 = vmax.xlane.f32.xlu0 %v470
    %v472 = vpop.xlane.xlu0 %471
    %v473 = vsel %vm155, %v469, -inf
    %474 = vmax.xlane.f32.xlu0 %v473
    %v475 = vpop.xlane.xlu0 %474
    %v476 = vsub.f32 %v468, %v472
    %v477 = vsub.f32 %v469, %v475
    %v478 = vmul.f32 %v476, 1.442695
    %v479 = vpow.pop %v478
    %v480 = vmul.f32 %v477, 1.442695
    %v481 = vpow.pop %v480
    %v482 = vsel %vm155, %v479, 0.0
    %483 = vadd.xlane.f32.xlu0 %v482
    %v484 = vpop.xlane.xlu0 %483
    %v485 = vsel %vm155, %v481, 0.0
    %486 = vadd.xlane.f32.xlu0 %v485
    %v487 = vpop.xlane.xlu0 %486
    %v488 = vrcp.pop %v484
    %v489 = vrcp.pop %v487
    %v490 = vmul.f32 %v479, %v488
    %v491 = vmul.f32 %v481, %v489
    %492 = vrot.lane.b32.xlu0 %v150, 112
    %v493 = vpop.permute.xlu0 %492
    %v496 = vsel %vm155, %v490, 0
    %498 = vmatpush.msra.mxu0 0.0
    %499 = vmatpush.msra.mxu0 0.0
    %500 = vmatpush.msra.mxu0 0.0
    %501 = vmatpush.msra.mxu0 0.0
    %502 = vmatpush.msra.mxu0 0.0
    %503 = vmatpush.msra.mxu0 0.0
    %504 = vmatpush.msra.mxu0 0.0
    %505 = vmatpush.msra.mxu0 0.0
    %506 = vmatpush.msra.mxu0 0.0
    %507 = vmatpush.msra.mxu0 0.0
    %508 = vmatpush.msra.mxu0 0.0
    %509 = vmatpush.msra.mxu0 0.0
    %510 = vmatpush.msra.mxu0 0.0
    %511 = vmatpush.msra.mxu0 0.0
    %512 = vmatpush.msra.mxu0 0.0
    %513 = vmatpush.msra.mxu0 %v493
    %514 = vmatmul.f32.gmra.mxu0 %v496
    %v515 = vpop.f32.mrf.mxu0
    %v516 = vadd.f32 0.0, %v515
    %517 = vdwg.mxu0
    %518 = vrot.lane.b32.xlu0 %v153, 112
    %v519 = vpop.permute.xlu0 %518
    %v522 = vsel %vm155, %v491, 0
    %524 = vmatpush.msra.mxu0 0.0
    %525 = vmatpush.msra.mxu0 0.0
    %526 = vmatpush.msra.mxu0 0.0
    %527 = vmatpush.msra.mxu0 0.0
    %528 = vmatpush.msra.mxu0 0.0
    %529 = vmatpush.msra.mxu0 0.0
    %530 = vmatpush.msra.mxu0 0.0
    %531 = vmatpush.msra.mxu0 0.0
    %532 = vmatpush.msra.mxu0 0.0
    %533 = vmatpush.msra.mxu0 0.0
    %534 = vmatpush.msra.mxu0 0.0
    %535 = vmatpush.msra.mxu0 0.0
    %536 = vmatpush.msra.mxu0 0.0
    %537 = vmatpush.msra.mxu0 0.0
    %538 = vmatpush.msra.mxu0 0.0
    %539 = vmatpush.msra.mxu0 %v519
    %540 = vmatmul.f32.gmra.mxu0 %v522
    %v541 = vpop.f32.mrf.mxu0
    %v542 = vadd.f32 0.0, %v541
    %543 = vdwg.mxu0
    %544 = vrot.lane.b32.xlu0 %v94, 104
    %v545 = vpop.permute.xlu0 %544
    %546 = vrot.lane.b32.xlu0 %v122, 104
    %v547 = vpop.permute.xlu0 %546
    %v548 = vsel %vm155, %v545, 0
    %v550 = vsel %vm155, %v547, 0
    %552 = vmatpush.xpose.msra.mxu0 0.0
    %553 = vmatpush.xpose.msra.mxu0 0.0
    %554 = vmatpush.xpose.msra.mxu0 0.0
    %555 = vmatpush.xpose.msra.mxu0 0.0
    %556 = vmatpush.xpose.msra.mxu0 0.0
    %557 = vmatpush.xpose.msra.mxu0 0.0
    %558 = vmatpush.xpose.msra.mxu0 0.0
    %559 = vmatpush.xpose.msra.mxu0 0.0
    %560 = vmatpush.xpose.msra.mxu0 0.0
    %561 = vmatpush.xpose.msra.mxu0 0.0
    %562 = vmatpush.xpose.msra.mxu0 0.0
    %563 = vmatpush.xpose.msra.mxu0 0.0
    %564 = vmatpush.xpose.msra.mxu0 0.0
    %565 = vmatpush.xpose.msra.mxu0 0.0
    %566 = vmatpush.xpose.msra.mxu0 0.0
    %567 = vmatpush.xpose.msra.mxu0 %v550
    %568 = vmatmul.f32.gmra.mxu0 %v548
    %v569 = vpop.f32.mrf.mxu0
    %v570 = vadd.f32 0.0, %v569
    %571 = vdwg.mxu0
    %572 = vrot.lane.b32.xlu0 %v97, 104
    %v573 = vpop.permute.xlu0 %572
    %574 = vrot.lane.b32.xlu0 %v125, 104
    %v575 = vpop.permute.xlu0 %574
    %v576 = vsel %vm155, %v573, 0
    %v578 = vsel %vm155, %v575, 0
    %580 = vmatpush.xpose.msra.mxu0 0.0
    %581 = vmatpush.xpose.msra.mxu0 0.0
    %582 = vmatpush.xpose.msra.mxu0 0.0
    %583 = vmatpush.xpose.msra.mxu0 0.0
    %584 = vmatpush.xpose.msra.mxu0 0.0
    %585 = vmatpush.xpose.msra.mxu0 0.0
    %586 = vmatpush.xpose.msra.mxu0 0.0
    %587 = vmatpush.xpose.msra.mxu0 0.0
    %588 = vmatpush.xpose.msra.mxu0 0.0
    %589 = vmatpush.xpose.msra.mxu0 0.0
    %590 = vmatpush.xpose.msra.mxu0 0.0
    %591 = vmatpush.xpose.msra.mxu0 0.0
    %592 = vmatpush.xpose.msra.mxu0 0.0
    %593 = vmatpush.xpose.msra.mxu0 0.0
    %594 = vmatpush.xpose.msra.mxu0 0.0
    %595 = vmatpush.xpose.msra.mxu0 %v578
    %596 = vmatmul.f32.gmra.mxu0 %v576
    %v597 = vpop.f32.mrf.mxu0
    %v598 = vadd.f32 0.0, %v597
    %599 = vdwg.mxu0
    %v600 = vmul.f32 %v570, 0.35355338
    %v601 = vmul.f32 %v598, 0.35355338
    %v602 = vsel %vm155, %v600, -inf
    %603 = vmax.xlane.f32.xlu0 %v602
    %v604 = vpop.xlane.xlu0 %603
    %v605 = vsel %vm155, %v601, -inf
    %606 = vmax.xlane.f32.xlu0 %v605
    %v607 = vpop.xlane.xlu0 %606
    %v608 = vsub.f32 %v600, %v604
    %v609 = vsub.f32 %v601, %v607
    %v610 = vmul.f32 %v608, 1.442695
    %v611 = vpow.pop %v610
    %v612 = vmul.f32 %v609, 1.442695
    %v613 = vpow.pop %v612
    %v614 = vsel %vm155, %v611, 0.0
    %615 = vadd.xlane.f32.xlu0 %v614
    %v616 = vpop.xlane.xlu0 %615
    %v617 = vsel %vm155, %v613, 0.0
    %618 = vadd.xlane.f32.xlu0 %v617
    %v619 = vpop.xlane.xlu0 %618
    %v620 = vrcp.pop %v616
    %v621 = vrcp.pop %v619
    %v622 = vmul.f32 %v611, %v620
    %v623 = vmul.f32 %v613, %v621
    %624 = vrot.lane.b32.xlu0 %v150, 104
    %v625 = vpop.permute.xlu0 %624
    %v628 = vsel %vm155, %v622, 0
    %630 = vmatpush.msra.mxu0 0.0
    %631 = vmatpush.msra.mxu0 0.0
    %632 = vmatpush.msra.mxu0 0.0
    %633 = vmatpush.msra.mxu0 0.0
    %634 = vmatpush.msra.mxu0 0.0
    %635 = vmatpush.msra.mxu0 0.0
    %636 = vmatpush.msra.mxu0 0.0
    %637 = vmatpush.msra.mxu0 0.0
    %638 = vmatpush.msra.mxu0 0.0
    %639 = vmatpush.msra.mxu0 0.0
    %640 = vmatpush.msra.mxu0 0.0
    %641 = vmatpush.msra.mxu0 0.0
    %642 = vmatpush.msra.mxu0 0.0
    %643 = vmatpush.msra.mxu0 0.0
    %644 = vmatpush.msra.mxu0 0.0
    %645 = vmatpush.msra.mxu0 %v625
    %646 = vmatmul.f32.gmra.mxu0 %v628
    %v647 = vpop.f32.mrf.mxu0
    %v648 = vadd.f32 0.0, %v647
    %649 = vdwg.mxu0
    %650 = vrot.lane.b32.xlu0 %v153, 104
    %v651 = vpop.permute.xlu0 %650
    %v654 = vsel %vm155, %v623, 0
    %656 = vmatpush.msra.mxu0 0.0
    %657 = vmatpush.msra.mxu0 0.0
    %658 = vmatpush.msra.mxu0 0.0
    %659 = vmatpush.msra.mxu0 0.0
    %660 = vmatpush.msra.mxu0 0.0
    %661 = vmatpush.msra.mxu0 0.0
    %662 = vmatpush.msra.mxu0 0.0
    %663 = vmatpush.msra.mxu0 0.0
    %664 = vmatpush.msra.mxu0 0.0
    %665 = vmatpush.msra.mxu0 0.0
    %666 = vmatpush.msra.mxu0 0.0
    %667 = vmatpush.msra.mxu0 0.0
    %668 = vmatpush.msra.mxu0 0.0
    %669 = vmatpush.msra.mxu0 0.0
    %670 = vmatpush.msra.mxu0 0.0
    %671 = vmatpush.msra.mxu0 %v651
    %672 = vmatmul.f32.gmra.mxu0 %v654
    %v673 = vpop.f32.mrf.mxu0
    %v674 = vadd.f32 0.0, %v673
    %675 = vdwg.mxu0
    %678 = vrot.lane.b32.xlu0 %v383, 8
    %v679 = vpop.permute.xlu0 %678
    %680 = vrot.lane.b32.xlu0 %v410, 8
    %v681 = vpop.permute.xlu0 %680
    %686 = vrot.lane.b32.xlu0 %v516, 16
    %v687 = vpop.permute.xlu0 %686
    %688 = vrot.lane.b32.xlu0 %v542, 16
    %v689 = vpop.permute.xlu0 %688
    %694 = vrot.lane.b32.xlu0 %v648, 24
    %v695 = vpop.permute.xlu0 %694
    %696 = vrot.lane.b32.xlu0 %v674, 24
    %v697 = vpop.permute.xlu0 %696
    %v700 = vsel %vm155, %v253, %v679
    %v701 = vsel %vm155, %v276, %v681
    %vm702 = vcmask 130048
    %v703 = vsel %vm702, %v700, %v687
    %v704 = vsel %vm702, %v701, %v689
    %vm705 = vcmask 195584
    %v706 = vsel %vm705, %v703, %v695
    %v707 = vsel %vm705, %v704, %v697
    %v708 = vld [vmem:[%s4] sm:$0xff]
    %v709 = vld [vmem:[%s4 + $0x8] sm:$0xff]
    %v710 = vld [vmem:[%s4 + $0x10] sm:$0xff]
    %v711 = vld [vmem:[%s4 + $0x18] sm:$0xff]
    %v712 = vperm.slane %v53, 0
    %v714 = vsel %vm69, %v706, 0
    %v717 = vsel %vm69, %v707, 0
    %719 = vmatpush.msra.mxu0 0.0
    %720 = vmatpush.msra.mxu0 0.0
    %721 = vmatpush.msra.mxu0 0.0
    %722 = vmatpush.msra.mxu0 0.0
    %723 = vmatpush.msra.mxu0 0.0
    %724 = vmatpush.msra.mxu0 0.0
    %725 = vmatpush.msra.mxu0 0.0
    %726 = vmatpush.msra.mxu0 0.0
    %727 = vmatpush.msra.mxu0 0.0
    %728 = vmatpush.msra.mxu0 0.0
    %729 = vmatpush.msra.mxu0 0.0
    %730 = vmatpush.msra.mxu0 0.0
    %731 = vmatpush.msra.mxu0 %v711
    %732 = vmatpush.msra.mxu0 %v710
    %733 = vmatpush.msra.mxu0 %v709
    %734 = vmatpush.msra.mxu0 %v708
    %735 = vmatmul.f32.gmra.mxu0 %v714
    %v736 = vpop.f32.mrf.mxu0
    %v737 = vadd.f32 %v712, %v736
    %738 = vmatmul.f32.gmra.mxu0 %v717
    %v739 = vpop.f32.mrf.mxu0
    %v740 = vadd.f32 %v712, %v739
    %741 = vdwg.mxu0
    %v742 = vadd.f32 %v62, %v737
    %v743 = vadd.f32 %v63, %v740
    %v744 = vsel %vm69, %v742, 0.0
    %745 = vadd.xlane.f32.xlu0 %v744
    %v746 = vpop.xlane.xlu0 %745
    %v747 = vsel %vm69, %v743, 0.0
    %748 = vadd.xlane.f32.xlu0 %v747
    %v749 = vpop.xlane.xlu0 %748
    %v750 = vrcp.pop 32.0
    %v751 = vmul.f32 32.0, %v750
    %v752 = vsub.f32 1.0, %v751
    %v753 = vmul.f32 %v750, %v752
    %v754 = vadd.f32 %v750, %v753
    %vm755 = vweird.f32 %v750
    %v756 = vsel %vm755, %v750, %v754
    %v757 = vmul.f32 %v746, %v756
    %v758 = vmul.f32 %v749, %v756
    %v759 = vsub.f32 %v742, %v757
    %v760 = vsub.f32 %v743, %v758
    %v761 = vmul.f32 %v759, %v759
    %v762 = vmul.f32 %v760, %v760
    %v763 = vsel %vm69, %v761, 0.0
    %764 = vadd.xlane.f32.xlu0 %v763
    %v765 = vpop.xlane.xlu0 %764
    %v766 = vsel %vm69, %v762, 0.0
    %767 = vadd.xlane.f32.xlu0 %v766
    %v768 = vpop.xlane.xlu0 %767
    %v769 = vmul.f32 %v765, %v756
    %v770 = vmul.f32 %v768, %v756
    %v771 = vadd.f32 %v769, 1e-05
    %v772 = vadd.f32 %v770, 1e-05
    %v773 = vrsqrt.pop %v771
    %v774 = vmul.f32 %v773, %v771
    %v775 = vmul.f32 %v774, %v773
    %v776 = vmul.f32 0.5, %v775
    %v777 = vsub.f32 1.5, %v776
    %v778 = vmul.f32 %v773, %v777
    %vm779 = vweird.f32 %v771
    %vm780 = vweird.f32 %v773
    %vm781 = vmor %vm779, %vm780
    %v782 = vsel %vm781, %v773, %v778
    %v783 = vrsqrt.pop %v772
    %v784 = vmul.f32 %v783, %v772
    %v785 = vmul.f32 %v784, %v783
    %v786 = vmul.f32 0.5, %v785
    %v787 = vsub.f32 1.5, %v786
    %v788 = vmul.f32 %v783, %v787
    %vm789 = vweird.f32 %v772
    %vm790 = vweird.f32 %v783
    %vm791 = vmor %vm789, %vm790
    %v792 = vsel %vm791, %v783, %v788
    %v793 = vmul.f32 %v759, %v782
    %v794 = vmul.f32 %v760, %v792
    %v795 = vperm.slane %v54, 0
    %v796 = vmul.f32 %v793, %v795
    %v797 = vmul.f32 %v794, %v795
    %v798 = vperm.slane %v55, 0
    %v799 = vadd.f32 %v796, %v798
    %v800 = vadd.f32 %v797, %v798
    %v801 = vld [vmem:[%s5] sm:$0xff]
    %v802 = vld [vmem:[%s5 + $0x8] sm:$0xff]
    %v803 = vld [vmem:[%s5 + $0x10] sm:$0xff]
    %v804 = vld [vmem:[%s5 + $0x18] sm:$0xff]
    %v805 = vperm.slane %v56, 0
    %v807 = vsel %vm69, %v799, 0
    %v810 = vsel %vm69, %v800, 0
    %812 = vmatpush.msra.mxu0 0.0
    %813 = vmatpush.msra.mxu0 0.0
    %814 = vmatpush.msra.mxu0 0.0
    %815 = vmatpush.msra.mxu0 0.0
    %816 = vmatpush.msra.mxu0 0.0
    %817 = vmatpush.msra.mxu0 0.0
    %818 = vmatpush.msra.mxu0 0.0
    %819 = vmatpush.msra.mxu0 0.0
    %820 = vmatpush.msra.mxu0 0.0
    %821 = vmatpush.msra.mxu0 0.0
    %822 = vmatpush.msra.mxu0 0.0
    %823 = vmatpush.msra.mxu0 0.0
    %824 = vmatpush.msra.mxu0 %v804
    %825 = vmatpush.msra.mxu0 %v803
    %826 = vmatpush.msra.mxu0 %v802
    %827 = vmatpush.msra.mxu0 %v801
    %828 = vmatmul.f32.gmra.mxu0 %v807
    %v829 = vpop.f32.mrf.mxu0
    %v830 = vadd.f32 %v805, %v829
    %831 = vmatmul.f32.gmra.mxu0 %v810
    %v832 = vpop.f32.mrf.mxu0
    %v833 = vadd.f32 %v805, %v832
    %834 = vdwg.mxu0
    %v835 = vmax.f32 %v830, 0.0
    %v836 = vmax.f32 %v833, 0.0
    %v837 = vld [vmem:[%s6] sm:$0xff]
    %v838 = vld [vmem:[%s6 + $0x8] sm:$0xff]
    %v839 = vld [vmem:[%s6 + $0x10] sm:$0xff]
    %v840 = vld [vmem:[%s6 + $0x18] sm:$0xff]
    %v841 = vld [vmem:[%s6 + $0x20] sm:$0xff]
    %v842 = vld [vmem:[%s6 + $0x28] sm:$0xff]
    %v843 = vld [vmem:[%s6 + $0x30] sm:$0xff]
    %v844 = vld [vmem:[%s6 + $0x38] sm:$0xff]
    %v845 = vld [vmem:[%s6 + $0x40] sm:$0xff]
    %v846 = vld [vmem:[%s6 + $0x48] sm:$0xff]
    %v847 = vld [vmem:[%s6 + $0x50] sm:$0xff]
    %v848 = vld [vmem:[%s6 + $0x58] sm:$0xff]
    %v849 = vld [vmem:[%s6 + $0x60] sm:$0xff]
    %v850 = vld [vmem:[%s6 + $0x68] sm:$0xff]
    %v851 = vld [vmem:[%s6 + $0x70] sm:$0xff]
    %v852 = vld [vmem:[%s6 + $0x78] sm:$0xff]
    %v853 = vperm.slane %v57, 0
    %854 = vmatpush.msra.mxu0 %v852
    %855 = vmatpush.msra.mxu0 %v851
    %856 = vmatpush.msra.mxu0 %v850
    %857 = vmatpush.msra.mxu0 %v849
    %858 = vmatpush.msra.mxu0 %v848
    %859 = vmatpush.msra.mxu0 %v847
    %860 = vmatpush.msra.mxu0 %v846
    %861 = vmatpush.msra.mxu0 %v845
    %862 = vmatpush.msra.mxu0 %v844
    %863 = vmatpush.msra.mxu0 %v843
    %864 = vmatpush.msra.mxu0 %v842
    %865 = vmatpush.msra.mxu0 %v841
    %866 = vmatpush.msra.mxu0 %v840
    %867 = vmatpush.msra.mxu0 %v839
    %868 = vmatpush.msra.mxu0 %v838
    %869 = vmatpush.msra.mxu0 %v837
    %870 = vmatmul.f32.gmra.mxu0 %v835
    %v871 = vpop.f32.mrf.mxu0
    %v872 = vadd.f32 %v853, %v871
    %873 = vmatmul.f32.gmra.mxu0 %v836
    %v874 = vpop.f32.mrf.mxu0
    %v875 = vadd.f32 %v853, %v874
    %876 = vdwg.mxu0
    %v877 = vadd.f32 %v799, %v872
    %v878 = vadd.f32 %v800, %v875
    %v879 = vsel %vm69, %v877, 0.0
    %880 = vadd.xlane.f32.xlu0 %v879
    %v881 = vpop.xlane.xlu0 %880
    %v882 = vsel %vm69, %v878, 0.0
    %883 = vadd.xlane.f32.xlu0 %v882
    %v884 = vpop.xlane.xlu0 %883
    %v885 = vmul.f32 %v881, %v756
    %v886 = vmul.f32 %v884, %v756
    %v887 = vsub.f32 %v877, %v885
    %v888 = vsub.f32 %v878, %v886
    %v889 = vmul.f32 %v887, %v887
    %v890 = vmul.f32 %v888, %v888
    %v891 = vsel %vm69, %v889, 0.0
    %892 = vadd.xlane.f32.xlu0 %v891
    %v893 = vpop.xlane.xlu0 %892
    %v894 = vsel %vm69, %v890, 0.0
    %895 = vadd.xlane.f32.xlu0 %v894
    %v896 = vpop.xlane.xlu0 %895
    %v897 = vmul.f32 %v893, %v756
    %v898 = vmul.f32 %v896, %v756
    %v899 = vadd.f32 %v897, 1e-05
    %v900 = vadd.f32 %v898, 1e-05
    %v901 = vrsqrt.pop %v899
    %v902 = vmul.f32 %v901, %v899
    %v903 = vmul.f32 %v902, %v901
    %v904 = vmul.f32 0.5, %v903
    %v905 = vsub.f32 1.5, %v904
    %v906 = vmul.f32 %v901, %v905
    %vm907 = vweird.f32 %v899
    %vm908 = vweird.f32 %v901
    %vm909 = vmor %vm907, %vm908
    %v910 = vsel %vm909, %v901, %v906
    %v911 = vrsqrt.pop %v900
    %v912 = vmul.f32 %v911, %v900
    %v913 = vmul.f32 %v912, %v911
    %v914 = vmul.f32 0.5, %v913
    %v915 = vsub.f32 1.5, %v914
    %v916 = vmul.f32 %v911, %v915
    %vm917 = vweird.f32 %v900
    %vm918 = vweird.f32 %v911
    %vm919 = vmor %vm917, %vm918
    %v920 = vsel %vm919, %v911, %v916
    %v921 = vmul.f32 %v887, %v910
    %v922 = vmul.f32 %v888, %v920
    %v923 = vperm.slane %v58, 0
    %v924 = vmul.f32 %v921, %v923
    %v925 = vmul.f32 %v922, %v923
    %v926 = vperm.slane %v59, 0
    %v927 = vadd.f32 %v924, %v926
    %v928 = vadd.f32 %v925, %v926
    %v929 = vadd.f32 %v927, %v62
    %v930 = vadd.f32 %v928, %v63
    %v931 = vld [vmem:[%s7] sm:$0xff]
    %v932 = vld [vmem:[%s7 + $0x8] sm:$0xff]
    %v933 = vld [vmem:[%s7 + $0x10] sm:$0xff]
    %v934 = vld [vmem:[%s7 + $0x18] sm:$0xff]
    %v935 = vperm.slane %v60, 0
    %v937 = vsel %vm69, %v929, 0
    %v940 = vsel %vm69, %v930, 0
    %942 = vmatpush.msra.mxu0 0.0
    %943 = vmatpush.msra.mxu0 0.0
    %944 = vmatpush.msra.mxu0 0.0
    %945 = vmatpush.msra.mxu0 0.0
    %946 = vmatpush.msra.mxu0 0.0
    %947 = vmatpush.msra.mxu0 0.0
    %948 = vmatpush.msra.mxu0 0.0
    %949 = vmatpush.msra.mxu0 0.0
    %950 = vmatpush.msra.mxu0 0.0
    %951 = vmatpush.msra.mxu0 0.0
    %952 = vmatpush.msra.mxu0 0.0
    %953 = vmatpush.msra.mxu0 0.0
    %954 = vmatpush.msra.mxu0 %v934
    %955 = vmatpush.msra.mxu0 %v933
    %956 = vmatpush.msra.mxu0 %v932
    %957 = vmatpush.msra.mxu0 %v931
    %958 = vmatmul.f32.gmra.mxu0 %v937
    %v959 = vpop.f32.mrf.mxu0
    %v960 = vadd.f32 %v935, %v959
    %961 = vmatmul.f32.gmra.mxu0 %v940
    %v962 = vpop.f32.mrf.mxu0
    %v963 = vadd.f32 %v935, %v962
    %964 = vdwg.mxu0
    %v965 = vlaneseq
    %v966 = vand.u32 %v965, 127
    %v967 = vand.u32 %v966, 31
    %vm968 = vcmp.lt.s32.totalorder %v967, 16
    %v969 = vsel %vm968, 1, 0
    %vm970 = vcmp.eq.s32.totalorder %v969, 1
    %v973 = vrot.slane %v963, 7
    %vm974 = vcmask 1041409
    %v975 = vsel %vm974, %v973, %v960
    %v977 = vrot.slane %v960, 7
    %v978 = vrot.slane %v963, 6
    %v979 = vsel %vm974, %v978, %v977
    %v981 = vsel %vm970, %v975, %v979
    %v982 = vrot.slane %v960, 1
    %v983 = vsel %vm974, %v963, %v982
    %v985 = vrot.slane %v960, 6
    %v986 = vrot.slane %v963, 5
    %v987 = vsel %vm974, %v986, %v985
    %v989 = vsel %vm970, %v983, %v987
    %v990 = vrot.slane %v960, 2
    %v991 = vrot.slane %v963, 1
    %v992 = vsel %vm974, %v991, %v990
    %v994 = vrot.slane %v960, 5
    %v995 = vrot.slane %v963, 4
    %v996 = vsel %vm974, %v995, %v994
    %v998 = vsel %vm970, %v992, %v996
    %v999 = vrot.slane %v960, 3
    %v1000 = vrot.slane %v963, 2
    %v1001 = vsel %vm974, %v1000, %v999
    %v1003 = vrot.slane %v960, 4
    %v1004 = vrot.slane %v963, 3
    %v1005 = vsel %vm974, %v1004, %v1003
    %v1007 = vsel %vm970, %v1001, %v1005
    %v1008 = vsel %vm970, %v1005, %v1001
    %v1009 = vsel %vm970, %v996, %v992
    %v1010 = vsel %vm970, %v987, %v983
    %v1011 = vsel %vm970, %v979, %v975
    %v1012 = vld [vmem:[%s11] sm:$0x3]
    %v1013 = vld [vmem:[%s11 + $0x2] sm:$0x3]
    %v1014 = vld [vmem:[%s11 + $0x4] sm:$0x3]
    %v1015 = vld [vmem:[%s11 + $0x6] sm:$0x3]
    %v1016 = vld [vmem:[%s11 + $0x8] sm:$0x3]
    %v1017 = vld [vmem:[%s11 + $0xa] sm:$0x3]
    %v1018 = vld [vmem:[%s11 + $0xc] sm:$0x3]
    %v1019 = vld [vmem:[%s11 + $0xe] sm:$0x3]
    %v1020 = vld [vmem:[%s8] sm:$0xff]
    %v1021 = vld [vmem:[%s8 + $0x8] sm:$0xff]
    %v1022 = vld [vmem:[%s8 + $0x10] sm:$0xff]
    %v1023 = vld [vmem:[%s8 + $0x18] sm:$0xff]
    %v1025 = vsel %vm69, 0.0, 0
    %1027 = vmatpush.msra.mxu0 0.0
    %1028 = vmatpush.msra.mxu0 0.0
    %1029 = vmatpush.msra.mxu0 0.0
    %1030 = vmatpush.msra.mxu0 0.0
    %1031 = vmatpush.msra.mxu0 0.0
    %1032 = vmatpush.msra.mxu0 0.0
    %1033 = vmatpush.msra.mxu0 0.0
    %1034 = vmatpush.msra.mxu0 0.0
    %1035 = vmatpush.msra.mxu0 0.0
    %1036 = vmatpush.msra.mxu0 0.0
    %1037 = vmatpush.msra.mxu0 0.0
    %1038 = vmatpush.msra.mxu0 0.0
    %1039 = vmatpush.msra.mxu0 %v1023
    %1040 = vmatpush.msra.mxu0 %v1022
    %1041 = vmatpush.msra.mxu0 %v1021
    %1042 = vmatpush.msra.mxu0 %v1020
    %1043 = vmatmul.f32.gmra.mxu0 %v1025
    %v1044 = vpop.f32.mrf.mxu0
    %v1045 = vadd.f32 0.0, %v1044
    %1046 = vdwg.mxu0
    %v1047 = vadd.f32 %v981, %v1045
    %v1048 = vxor.u32 %v1047, 2147483648
    %v1049 = vmul.f32 %v1048, 1.442695
    %v1050 = vpow.pop %v1049
    %v1051 = vadd.f32 %v1050, 1.0
    %v1052 = vrcp.pop %v1051
    %v1053 = vmul.f32 %v1051, %v1052
    %v1054 = vsub.f32 1.0, %v1053
    %v1055 = vmul.f32 %v1052, %v1054
    %v1056 = vadd.f32 %v1052, %v1055
    %vm1057 = vweird.f32 %v1051
    %vm1058 = vweird.f32 %v1052
    %vm1059 = vmor %vm1057, %vm1058
    %v1060 = vsel %vm1059, %v1052, %v1056
    %v1061 = vand.u32 2147483647, %v1051
    %vm1062 = vcmp.eq.f32.partialorder %v1061, 8.507059e+37
    %v1063 = vand.u32 %v1051, 2147483648
    %v1064 = vor.u32 1.1754944e-38, %v1063
    %v1065 = vsel %vm1062, %v1064, %v1060
    %v1066 = vmul.f32 1.0, %v1065
    %v1067 = vtanh.pop %v1047
    %v1068 = vmul.f32 %v1066, 0.0
    %1070 = vrot.lane.b32.xlu0 %v1067, 32
    %v1071 = vpop.permute.xlu0 %1070
    %v1073 = vmul.f32 %v1066, %v1071
    %1075 = vrot.lane.b32.xlu0 %v1073, 32
    %v1076 = vpop.permute.xlu0 %1075
    %v1078 = vadd.f32 %v1068, %v1076
    %v1079 = vtanh.pop %v1078
    %1081 = vrot.lane.b32.xlu0 %v1079, 32
    %v1082 = vpop.permute.xlu0 %1081
    %v1084 = vmul.f32 %v1066, %v1082
    %1086 = vrot.lane.b32.xlu0 %v1012, 64
    %v1087 = vpop.permute.xlu0 %1086
    %v1089 = vmul.f32 %v1084, %v1087
    %vm1090 = vcmp.gt.f32.partialorder %v1012, 0.0
    %1092 = vrot.lane.b32.xlu0 %v1084, 64
    %v1093 = vpop.permute.xlu0 %1092
    %v1095 = vsel %vm1090, %v1093, 0.0
    %1097 = vrot.lane.b32.xlu0 %v1078, 96
    %v1098 = vpop.permute.xlu0 %1097
    %v1100 = vsel %vm1090, %v1098, 0.0
    %v1102 = vsel %vm69, %v1095, 0
    %1104 = vmatpush.msra.mxu0 0.0
    %1105 = vmatpush.msra.mxu0 0.0
    %1106 = vmatpush.msra.mxu0 0.0
    %1107 = vmatpush.msra.mxu0 0.0
    %1108 = vmatpush.msra.mxu0 0.0
    %1109 = vmatpush.msra.mxu0 0.0
    %1110 = vmatpush.msra.mxu0 0.0
    %1111 = vmatpush.msra.mxu0 0.0
    %1112 = vmatpush.msra.mxu0 0.0
    %1113 = vmatpush.msra.mxu0 0.0
    %1114 = vmatpush.msra.mxu0 0.0
    %1115 = vmatpush.msra.mxu0 0.0
    %1116 = vmatpush.msra.mxu0 %v1023
    %1117 = vmatpush.msra.mxu0 %v1022
    %1118 = vmatpush.msra.mxu0 %v1021
    %1119 = vmatpush.msra.mxu0 %v1020
    %1120 = vmatmul.f32.gmra.mxu0 %v1102
    %v1121 = vpop.f32.mrf.mxu0
    %v1122 = vadd.f32 0.0, %v1121
    %1123 = vdwg.mxu0
    %v1124 = vadd.f32 %v989, %v1122
    %v1125 = vxor.u32 %v1124, 2147483648
    %v1126 = vmul.f32 %v1125, 1.442695
    %v1127 = vpow.pop %v1126
    %v1128 = vadd.f32 %v1127, 1.0
    %v1129 = vrcp.pop %v1128
    %v1130 = vmul.f32 %v1128, %v1129
    %v1131 = vsub.f32 1.0, %v1130
    %v1132 = vmul.f32 %v1129, %v1131
    %v1133 = vadd.f32 %v1129, %v1132
    %vm1134 = vweird.f32 %v1128
    %vm1135 = vweird.f32 %v1129
    %vm1136 = vmor %vm1134, %vm1135
    %v1137 = vsel %vm1136, %v1129, %v1133
    %v1138 = vand.u32 2147483647, %v1128
    %vm1139 = vcmp.eq.f32.partialorder %v1138, 8.507059e+37
    %v1140 = vand.u32 %v1128, 2147483648
    %v1141 = vor.u32 1.1754944e-38, %v1140
    %v1142 = vsel %vm1139, %v1141, %v1137
    %v1143 = vmul.f32 1.0, %v1142
    %v1144 = vtanh.pop %v1124
    %1146 = vrot.lane.b32.xlu0 %v1100, 32
    %v1147 = vpop.permute.xlu0 %1146
    %v1149 = vmul.f32 %v1143, %v1147
    %1151 = vrot.lane.b32.xlu0 %v1144, 32
    %v1152 = vpop.permute.xlu0 %1151
    %v1154 = vmul.f32 %v1143, %v1152
    %1156 = vrot.lane.b32.xlu0 %v1154, 32
    %v1157 = vpop.permute.xlu0 %1156
    %v1159 = vadd.f32 %v1149, %v1157
    %v1160 = vtanh.pop %v1159
    %1162 = vrot.lane.b32.xlu0 %v1160, 32
    %v1163 = vpop.permute.xlu0 %1162
    %v1165 = vmul.f32 %v1143, %v1163
    %1167 = vrot.lane.b32.xlu0 %v1013, 64
    %v1168 = vpop.permute.xlu0 %1167
    %v1170 = vmul.f32 %v1165, %v1168
    %vm1171 = vcmp.gt.f32.partialorder %v1013, 0.0
    %1173 = vrot.lane.b32.xlu0 %v1165, 64
    %v1174 = vpop.permute.xlu0 %1173
    %v1176 = vsel %vm1171, %v1174, %v1095
    %1178 = vrot.lane.b32.xlu0 %v1159, 96
    %v1179 = vpop.permute.xlu0 %1178
    %v1181 = vsel %vm1171, %v1179, %v1100
    %v1183 = vsel %vm69, %v1176, 0
    %1185 = vmatpush.msra.mxu0 0.0
    %1186 = vmatpush.msra.mxu0 0.0
    %1187 = vmatpush.msra.mxu0 0.0
    %1188 = vmatpush.msra.mxu0 0.0
    %1189 = vmatpush.msra.mxu0 0.0
    %1190 = vmatpush.msra.mxu0 0.0
    %1191 = vmatpush.msra.mxu0 0.0
    %1192 = vmatpush.msra.mxu0 0.0
    %1193 = vmatpush.msra.mxu0 0.0
    %1194 = vmatpush.msra.mxu0 0.0
    %1195 = vmatpush.msra.mxu0 0.0
    %1196 = vmatpush.msra.mxu0 0.0
    %1197 = vmatpush.msra.mxu0 %v1023
    %1198 = vmatpush.msra.mxu0 %v1022
    %1199 = vmatpush.msra.mxu0 %v1021
    %1200 = vmatpush.msra.mxu0 %v1020
    %1201 = vmatmul.f32.gmra.mxu0 %v1183
    %v1202 = vpop.f32.mrf.mxu0
    %v1203 = vadd.f32 0.0, %v1202
    %1204 = vdwg.mxu0
    %v1205 = vadd.f32 %v998, %v1203
    %v1206 = vxor.u32 %v1205, 2147483648
    %v1207 = vmul.f32 %v1206, 1.442695
    %v1208 = vpow.pop %v1207
    %v1209 = vadd.f32 %v1208, 1.0
    %v1210 = vrcp.pop %v1209
    %v1211 = vmul.f32 %v1209, %v1210
    %v1212 = vsub.f32 1.0, %v1211
    %v1213 = vmul.f32 %v1210, %v1212
    %v1214 = vadd.f32 %v1210, %v1213
    %vm1215 = vweird.f32 %v1209
    %vm1216 = vweird.f32 %v1210
    %vm1217 = vmor %vm1215, %vm1216
    %v1218 = vsel %vm1217, %v1210, %v1214
    %v1219 = vand.u32 2147483647, %v1209
    %vm1220 = vcmp.eq.f32.partialorder %v1219, 8.507059e+37
    %v1221 = vand.u32 %v1209, 2147483648
    %v1222 = vor.u32 1.1754944e-38, %v1221
    %v1223 = vsel %vm1220, %v1222, %v1218
    %v1224 = vmul.f32 1.0, %v1223
    %v1225 = vtanh.pop %v1205
    %1227 = vrot.lane.b32.xlu0 %v1181, 32
    %v1228 = vpop.permute.xlu0 %1227
    %v1230 = vmul.f32 %v1224, %v1228
    %1232 = vrot.lane.b32.xlu0 %v1225, 32
    %v1233 = vpop.permute.xlu0 %1232
    %v1235 = vmul.f32 %v1224, %v1233
    %1237 = vrot.lane.b32.xlu0 %v1235, 32
    %v1238 = vpop.permute.xlu0 %1237
    %v1240 = vadd.f32 %v1230, %v1238
    %v1241 = vtanh.pop %v1240
    %1243 = vrot.lane.b32.xlu0 %v1241, 32
    %v1244 = vpop.permute.xlu0 %1243
    %v1246 = vmul.f32 %v1224, %v1244
    %1248 = vrot.lane.b32.xlu0 %v1014, 64
    %v1249 = vpop.permute.xlu0 %1248
    %v1251 = vmul.f32 %v1246, %v1249
    %vm1252 = vcmp.gt.f32.partialorder %v1014, 0.0
    %1254 = vrot.lane.b32.xlu0 %v1246, 64
    %v1255 = vpop.permute.xlu0 %1254
    %v1257 = vsel %vm1252, %v1255, %v1176
    %1259 = vrot.lane.b32.xlu0 %v1240, 96
    %v1260 = vpop.permute.xlu0 %1259
    %v1262 = vsel %vm1252, %v1260, %v1181
    %v1264 = vsel %vm69, %v1257, 0
    %1266 = vmatpush.msra.mxu0 0.0
    %1267 = vmatpush.msra.mxu0 0.0
    %1268 = vmatpush.msra.mxu0 0.0
    %1269 = vmatpush.msra.mxu0 0.0
    %1270 = vmatpush.msra.mxu0 0.0
    %1271 = vmatpush.msra.mxu0 0.0
    %1272 = vmatpush.msra.mxu0 0.0
    %1273 = vmatpush.msra.mxu0 0.0
    %1274 = vmatpush.msra.mxu0 0.0
    %1275 = vmatpush.msra.mxu0 0.0
    %1276 = vmatpush.msra.mxu0 0.0
    %1277 = vmatpush.msra.mxu0 0.0
    %1278 = vmatpush.msra.mxu0 %v1023
    %1279 = vmatpush.msra.mxu0 %v1022
    %1280 = vmatpush.msra.mxu0 %v1021
    %1281 = vmatpush.msra.mxu0 %v1020
    %1282 = vmatmul.f32.gmra.mxu0 %v1264
    %v1283 = vpop.f32.mrf.mxu0
    %v1284 = vadd.f32 0.0, %v1283
    %1285 = vdwg.mxu0
    %v1286 = vadd.f32 %v1007, %v1284
    %v1287 = vxor.u32 %v1286, 2147483648
    %v1288 = vmul.f32 %v1287, 1.442695
    %v1289 = vpow.pop %v1288
    %v1290 = vadd.f32 %v1289, 1.0
    %v1291 = vrcp.pop %v1290
    %v1292 = vmul.f32 %v1290, %v1291
    %v1293 = vsub.f32 1.0, %v1292
    %v1294 = vmul.f32 %v1291, %v1293
    %v1295 = vadd.f32 %v1291, %v1294
    %vm1296 = vweird.f32 %v1290
    %vm1297 = vweird.f32 %v1291
    %vm1298 = vmor %vm1296, %vm1297
    %v1299 = vsel %vm1298, %v1291, %v1295
    %v1300 = vand.u32 2147483647, %v1290
    %vm1301 = vcmp.eq.f32.partialorder %v1300, 8.507059e+37
    %v1302 = vand.u32 %v1290, 2147483648
    %v1303 = vor.u32 1.1754944e-38, %v1302
    %v1304 = vsel %vm1301, %v1303, %v1299
    %v1305 = vmul.f32 1.0, %v1304
    %v1306 = vtanh.pop %v1286
    %1308 = vrot.lane.b32.xlu0 %v1262, 32
    %v1309 = vpop.permute.xlu0 %1308
    %v1311 = vmul.f32 %v1305, %v1309
    %1313 = vrot.lane.b32.xlu0 %v1306, 32
    %v1314 = vpop.permute.xlu0 %1313
    %v1316 = vmul.f32 %v1305, %v1314
    %1318 = vrot.lane.b32.xlu0 %v1316, 32
    %v1319 = vpop.permute.xlu0 %1318
    %v1321 = vadd.f32 %v1311, %v1319
    %v1322 = vtanh.pop %v1321
    %1324 = vrot.lane.b32.xlu0 %v1322, 32
    %v1325 = vpop.permute.xlu0 %1324
    %v1327 = vmul.f32 %v1305, %v1325
    %1329 = vrot.lane.b32.xlu0 %v1015, 64
    %v1330 = vpop.permute.xlu0 %1329
    %v1332 = vmul.f32 %v1327, %v1330
    %vm1333 = vcmp.gt.f32.partialorder %v1015, 0.0
    %1335 = vrot.lane.b32.xlu0 %v1327, 64
    %v1336 = vpop.permute.xlu0 %1335
    %v1338 = vsel %vm1333, %v1336, %v1257
    %1340 = vrot.lane.b32.xlu0 %v1321, 96
    %v1341 = vpop.permute.xlu0 %1340
    %v1343 = vsel %vm1333, %v1341, %v1262
    %v1345 = vsel %vm69, %v1338, 0
    %1347 = vmatpush.msra.mxu0 0.0
    %1348 = vmatpush.msra.mxu0 0.0
    %1349 = vmatpush.msra.mxu0 0.0
    %1350 = vmatpush.msra.mxu0 0.0
    %1351 = vmatpush.msra.mxu0 0.0
    %1352 = vmatpush.msra.mxu0 0.0
    %1353 = vmatpush.msra.mxu0 0.0
    %1354 = vmatpush.msra.mxu0 0.0
    %1355 = vmatpush.msra.mxu0 0.0
    %1356 = vmatpush.msra.mxu0 0.0
    %1357 = vmatpush.msra.mxu0 0.0
    %1358 = vmatpush.msra.mxu0 0.0
    %1359 = vmatpush.msra.mxu0 %v1023
    %1360 = vmatpush.msra.mxu0 %v1022
    %1361 = vmatpush.msra.mxu0 %v1021
    %1362 = vmatpush.msra.mxu0 %v1020
    %1363 = vmatmul.f32.gmra.mxu0 %v1345
    %v1364 = vpop.f32.mrf.mxu0
    %v1365 = vadd.f32 0.0, %v1364
    %1366 = vdwg.mxu0
    %v1367 = vadd.f32 %v1008, %v1365
    %v1368 = vxor.u32 %v1367, 2147483648
    %v1369 = vmul.f32 %v1368, 1.442695
    %v1370 = vpow.pop %v1369
    %v1371 = vadd.f32 %v1370, 1.0
    %v1372 = vrcp.pop %v1371
    %v1373 = vmul.f32 %v1371, %v1372
    %v1374 = vsub.f32 1.0, %v1373
    %v1375 = vmul.f32 %v1372, %v1374
    %v1376 = vadd.f32 %v1372, %v1375
    %vm1377 = vweird.f32 %v1371
    %vm1378 = vweird.f32 %v1372
    %vm1379 = vmor %vm1377, %vm1378
    %v1380 = vsel %vm1379, %v1372, %v1376
    %v1381 = vand.u32 2147483647, %v1371
    %vm1382 = vcmp.eq.f32.partialorder %v1381, 8.507059e+37
    %v1383 = vand.u32 %v1371, 2147483648
    %v1384 = vor.u32 1.1754944e-38, %v1383
    %v1385 = vsel %vm1382, %v1384, %v1380
    %v1386 = vmul.f32 1.0, %v1385
    %v1387 = vtanh.pop %v1367
    %1389 = vrot.lane.b32.xlu0 %v1343, 32
    %v1390 = vpop.permute.xlu0 %1389
    %v1392 = vmul.f32 %v1386, %v1390
    %1394 = vrot.lane.b32.xlu0 %v1387, 32
    %v1395 = vpop.permute.xlu0 %1394
    %v1397 = vmul.f32 %v1386, %v1395
    %1399 = vrot.lane.b32.xlu0 %v1397, 32
    %v1400 = vpop.permute.xlu0 %1399
    %v1402 = vadd.f32 %v1392, %v1400
    %v1403 = vtanh.pop %v1402
    %1405 = vrot.lane.b32.xlu0 %v1403, 32
    %v1406 = vpop.permute.xlu0 %1405
    %v1408 = vmul.f32 %v1386, %v1406
    %1410 = vrot.lane.b32.xlu0 %v1016, 64
    %v1411 = vpop.permute.xlu0 %1410
    %v1413 = vmul.f32 %v1408, %v1411
    %vm1414 = vcmp.gt.f32.partialorder %v1016, 0.0
    %1416 = vrot.lane.b32.xlu0 %v1408, 64
    %v1417 = vpop.permute.xlu0 %1416
    %v1419 = vsel %vm1414, %v1417, %v1338
    %1421 = vrot.lane.b32.xlu0 %v1402, 96
    %v1422 = vpop.permute.xlu0 %1421
    %v1424 = vsel %vm1414, %v1422, %v1343
    %v1426 = vsel %vm69, %v1419, 0
    %1428 = vmatpush.msra.mxu0 0.0
    %1429 = vmatpush.msra.mxu0 0.0
    %1430 = vmatpush.msra.mxu0 0.0
    %1431 = vmatpush.msra.mxu0 0.0
    %1432 = vmatpush.msra.mxu0 0.0
    %1433 = vmatpush.msra.mxu0 0.0
    %1434 = vmatpush.msra.mxu0 0.0
    %1435 = vmatpush.msra.mxu0 0.0
    %1436 = vmatpush.msra.mxu0 0.0
    %1437 = vmatpush.msra.mxu0 0.0
    %1438 = vmatpush.msra.mxu0 0.0
    %1439 = vmatpush.msra.mxu0 0.0
    %1440 = vmatpush.msra.mxu0 %v1023
    %1441 = vmatpush.msra.mxu0 %v1022
    %1442 = vmatpush.msra.mxu0 %v1021
    %1443 = vmatpush.msra.mxu0 %v1020
    %1444 = vmatmul.f32.gmra.mxu0 %v1426
    %v1445 = vpop.f32.mrf.mxu0
    %v1446 = vadd.f32 0.0, %v1445
    %1447 = vdwg.mxu0
    %v1448 = vadd.f32 %v1009, %v1446
    %v1449 = vxor.u32 %v1448, 2147483648
    %v1450 = vmul.f32 %v1449, 1.442695
    %v1451 = vpow.pop %v1450
    %v1452 = vadd.f32 %v1451, 1.0
    %v1453 = vrcp.pop %v1452
    %v1454 = vmul.f32 %v1452, %v1453
    %v1455 = vsub.f32 1.0, %v1454
    %v1456 = vmul.f32 %v1453, %v1455
    %v1457 = vadd.f32 %v1453, %v1456
    %vm1458 = vweird.f32 %v1452
    %vm1459 = vweird.f32 %v1453
    %vm1460 = vmor %vm1458, %vm1459
    %v1461 = vsel %vm1460, %v1453, %v1457
    %v1462 = vand.u32 2147483647, %v1452
    %vm1463 = vcmp.eq.f32.partialorder %v1462, 8.507059e+37
    %v1464 = vand.u32 %v1452, 2147483648
    %v1465 = vor.u32 1.1754944e-38, %v1464
    %v1466 = vsel %vm1463, %v1465, %v1461
    %v1467 = vmul.f32 1.0, %v1466
    %v1468 = vtanh.pop %v1448
    %1470 = vrot.lane.b32.xlu0 %v1424, 32
    %v1471 = vpop.permute.xlu0 %1470
    %v1473 = vmul.f32 %v1467, %v1471
    %1475 = vrot.lane.b32.xlu0 %v1468, 32
    %v1476 = vpop.permute.xlu0 %1475
    %v1478 = vmul.f32 %v1467, %v1476
    %1480 = vrot.lane.b32.xlu0 %v1478, 32
    %v1481 = vpop.permute.xlu0 %1480
    %v1483 = vadd.f32 %v1473, %v1481
    %v1484 = vtanh.pop %v1483
    %1486 = vrot.lane.b32.xlu0 %v1484, 32
    %v1487 = vpop.permute.xlu0 %1486
    %v1489 = vmul.f32 %v1467, %v1487
    %1491 = vrot.lane.b32.xlu0 %v1017, 64
    %v1492 = vpop.permute.xlu0 %1491
    %v1494 = vmul.f32 %v1489, %v1492
    %vm1495 = vcmp.gt.f32.partialorder %v1017, 0.0
    %1497 = vrot.lane.b32.xlu0 %v1489, 64
    %v1498 = vpop.permute.xlu0 %1497
    %v1500 = vsel %vm1495, %v1498, %v1419
    %1502 = vrot.lane.b32.xlu0 %v1483, 96
    %v1503 = vpop.permute.xlu0 %1502
    %v1505 = vsel %vm1495, %v1503, %v1424
    %v1507 = vsel %vm69, %v1500, 0
    %1509 = vmatpush.msra.mxu0 0.0
    %1510 = vmatpush.msra.mxu0 0.0
    %1511 = vmatpush.msra.mxu0 0.0
    %1512 = vmatpush.msra.mxu0 0.0
    %1513 = vmatpush.msra.mxu0 0.0
    %1514 = vmatpush.msra.mxu0 0.0
    %1515 = vmatpush.msra.mxu0 0.0
    %1516 = vmatpush.msra.mxu0 0.0
    %1517 = vmatpush.msra.mxu0 0.0
    %1518 = vmatpush.msra.mxu0 0.0
    %1519 = vmatpush.msra.mxu0 0.0
    %1520 = vmatpush.msra.mxu0 0.0
    %1521 = vmatpush.msra.mxu0 %v1023
    %1522 = vmatpush.msra.mxu0 %v1022
    %1523 = vmatpush.msra.mxu0 %v1021
    %1524 = vmatpush.msra.mxu0 %v1020
    %1525 = vmatmul.f32.gmra.mxu0 %v1507
    %v1526 = vpop.f32.mrf.mxu0
    %v1527 = vadd.f32 0.0, %v1526
    %1528 = vdwg.mxu0
    %v1529 = vadd.f32 %v1010, %v1527
    %v1530 = vxor.u32 %v1529, 2147483648
    %v1531 = vmul.f32 %v1530, 1.442695
    %v1532 = vpow.pop %v1531
    %v1533 = vadd.f32 %v1532, 1.0
    %v1534 = vrcp.pop %v1533
    %v1535 = vmul.f32 %v1533, %v1534
    %v1536 = vsub.f32 1.0, %v1535
    %v1537 = vmul.f32 %v1534, %v1536
    %v1538 = vadd.f32 %v1534, %v1537
    %vm1539 = vweird.f32 %v1533
    %vm1540 = vweird.f32 %v1534
    %vm1541 = vmor %vm1539, %vm1540
    %v1542 = vsel %vm1541, %v1534, %v1538
    %v1543 = vand.u32 2147483647, %v1533
    %vm1544 = vcmp.eq.f32.partialorder %v1543, 8.507059e+37
    %v1545 = vand.u32 %v1533, 2147483648
    %v1546 = vor.u32 1.1754944e-38, %v1545
    %v1547 = vsel %vm1544, %v1546, %v1542
    %v1548 = vmul.f32 1.0, %v1547
    %v1549 = vtanh.pop %v1529
    %1551 = vrot.lane.b32.xlu0 %v1505, 32
    %v1552 = vpop.permute.xlu0 %1551
    %v1554 = vmul.f32 %v1548, %v1552
    %1556 = vrot.lane.b32.xlu0 %v1549, 32
    %v1557 = vpop.permute.xlu0 %1556
    %v1559 = vmul.f32 %v1548, %v1557
    %1561 = vrot.lane.b32.xlu0 %v1559, 32
    %v1562 = vpop.permute.xlu0 %1561
    %v1564 = vadd.f32 %v1554, %v1562
    %v1565 = vtanh.pop %v1564
    %1567 = vrot.lane.b32.xlu0 %v1565, 32
    %v1568 = vpop.permute.xlu0 %1567
    %v1570 = vmul.f32 %v1548, %v1568
    %1572 = vrot.lane.b32.xlu0 %v1018, 64
    %v1573 = vpop.permute.xlu0 %1572
    %v1575 = vmul.f32 %v1570, %v1573
    %vm1576 = vcmp.gt.f32.partialorder %v1018, 0.0
    %1578 = vrot.lane.b32.xlu0 %v1570, 64
    %v1579 = vpop.permute.xlu0 %1578
    %v1581 = vsel %vm1576, %v1579, %v1500
    %1583 = vrot.lane.b32.xlu0 %v1564, 96
    %v1584 = vpop.permute.xlu0 %1583
    %v1586 = vsel %vm1576, %v1584, %v1505
    %v1588 = vsel %vm69, %v1581, 0
    %1590 = vmatpush.msra.mxu0 0.0
    %1591 = vmatpush.msra.mxu0 0.0
    %1592 = vmatpush.msra.mxu0 0.0
    %1593 = vmatpush.msra.mxu0 0.0
    %1594 = vmatpush.msra.mxu0 0.0
    %1595 = vmatpush.msra.mxu0 0.0
    %1596 = vmatpush.msra.mxu0 0.0
    %1597 = vmatpush.msra.mxu0 0.0
    %1598 = vmatpush.msra.mxu0 0.0
    %1599 = vmatpush.msra.mxu0 0.0
    %1600 = vmatpush.msra.mxu0 0.0
    %1601 = vmatpush.msra.mxu0 0.0
    %1602 = vmatpush.msra.mxu0 %v1023
    %1603 = vmatpush.msra.mxu0 %v1022
    %1604 = vmatpush.msra.mxu0 %v1021
    %1605 = vmatpush.msra.mxu0 %v1020
    %1606 = vmatmul.f32.gmra.mxu0 %v1588
    %v1607 = vpop.f32.mrf.mxu0
    %v1608 = vadd.f32 0.0, %v1607
    %1609 = vdwg.mxu0
    %v1610 = vadd.f32 %v1011, %v1608
    %v1611 = vxor.u32 %v1610, 2147483648
    %v1612 = vmul.f32 %v1611, 1.442695
    %v1613 = vpow.pop %v1612
    %v1614 = vadd.f32 %v1613, 1.0
    %v1615 = vrcp.pop %v1614
    %v1616 = vmul.f32 %v1614, %v1615
    %v1617 = vsub.f32 1.0, %v1616
    %v1618 = vmul.f32 %v1615, %v1617
    %v1619 = vadd.f32 %v1615, %v1618
    %vm1620 = vweird.f32 %v1614
    %vm1621 = vweird.f32 %v1615
    %vm1622 = vmor %vm1620, %vm1621
    %v1623 = vsel %vm1622, %v1615, %v1619
    %v1624 = vand.u32 2147483647, %v1614
    %vm1625 = vcmp.eq.f32.partialorder %v1624, 8.507059e+37
    %v1626 = vand.u32 %v1614, 2147483648
    %v1627 = vor.u32 1.1754944e-38, %v1626
    %v1628 = vsel %vm1625, %v1627, %v1623
    %v1629 = vmul.f32 1.0, %v1628
    %v1630 = vtanh.pop %v1610
    %1632 = vrot.lane.b32.xlu0 %v1586, 32
    %v1633 = vpop.permute.xlu0 %1632
    %v1635 = vmul.f32 %v1629, %v1633
    %1637 = vrot.lane.b32.xlu0 %v1630, 32
    %v1638 = vpop.permute.xlu0 %1637
    %v1640 = vmul.f32 %v1629, %v1638
    %1642 = vrot.lane.b32.xlu0 %v1640, 32
    %v1643 = vpop.permute.xlu0 %1642
    %v1645 = vadd.f32 %v1635, %v1643
    %v1646 = vtanh.pop %v1645
    %1648 = vrot.lane.b32.xlu0 %v1646, 32
    %v1649 = vpop.permute.xlu0 %1648
    %v1651 = vmul.f32 %v1629, %v1649
    %1653 = vrot.lane.b32.xlu0 %v1019, 64
    %v1654 = vpop.permute.xlu0 %1653
    %v1656 = vmul.f32 %v1651, %v1654
    %v1658 = vrot.slane %v1089, 1
    %v1661 = vrot.slane %v1170, 1
    %v1663 = vrot.slane %v1251, 1
    %v1665 = vrot.slane %v1332, 1
    %v1667 = vrot.slane %v1413, 1
    %v1669 = vrot.slane %v1494, 1
    %v1671 = vrot.slane %v1575, 1
    %v1673 = vrot.slane %v1656, 1
    %v1674 = vperm.slane %v1170, 0
    %v1675 = vperm.slane %v1661, 0
    %v1678 = vperm.slane %v1251, 0
    %v1679 = vperm.slane %v1663, 0
    %v1682 = vperm.slane %v1332, 0
    %v1683 = vperm.slane %v1665, 0
    %v1686 = vperm.slane %v1413, 0
    %v1687 = vperm.slane %v1667, 0
    %v1690 = vperm.slane %v1494, 0
    %v1691 = vperm.slane %v1669, 0
    %v1694 = vperm.slane %v1575, 0
    %v1695 = vperm.slane %v1671, 0
    %v1698 = vperm.slane %v1656, 0
    %v1699 = vperm.slane %v1673, 0
    %vm1702 = vcmask 1040384
    %v1703 = vsel %vm1702, %v1089, %v1674
    %v1704 = vsel %vm1702, %v1658, %v1675
    %vm1705 = vcmask 1041408
    %v1706 = vsel %vm1705, %v1703, %v1678
    %v1707 = vsel %vm1705, %v1704, %v1679
    %vm1708 = vcmask 1042432
    %v1709 = vsel %vm1708, %v1706, %v1682
    %v1710 = vsel %vm1708, %v1707, %v1683
    %vm1711 = vcmask 1043456
    %v1712 = vsel %vm1711, %v1709, %v1686
    %v1713 = vsel %vm1711, %v1710, %v1687
    %vm1714 = vcmask 1044480
    %v1715 = vsel %vm1714, %v1712, %v1690
    %v1716 = vsel %vm1714, %v1713, %v1691
    %vm1717 = vcmask 1045504
    %v1718 = vsel %vm1717, %v1715, %v1694
    %v1719 = vsel %vm1717, %v1716, %v1695
    %vm1720 = vcmask 1046528
    %v1721 = vsel %vm1720, %v1718, %v1698
    %v1722 = vsel %vm1720, %v1719, %v1699
    %v1724 = vperm.slane %v1089, 0
    %v1725 = vperm.slane %v1658, 0
    %v1728 = vsel %vm1702, %v1656, %v1694
    %v1729 = vsel %vm1702, %v1673, %v1695
    %v1730 = vsel %vm1705, %v1728, %v1690
    %v1731 = vsel %vm1705, %v1729, %v1691
    %v1732 = vsel %vm1708, %v1730, %v1686
    %v1733 = vsel %vm1708, %v1731, %v1687
    %v1734 = vsel %vm1711, %v1732, %v1682
    %v1735 = vsel %vm1711, %v1733, %v1683
    %v1736 = vsel %vm1714, %v1734, %v1678
    %v1737 = vsel %vm1714, %v1735, %v1679
    %v1738 = vsel %vm1717, %v1736, %v1674
    %v1739 = vsel %vm1717, %v1737, %v1675
    %v1740 = vsel %vm1720, %v1738, %v1724
    %v1741 = vsel %vm1720, %v1739, %v1725
    %1744 = vrot.lane.b32.xlu0 %v1721, 64
    %v1745 = vpop.permute.xlu0 %1744
    %1746 = vrot.lane.b32.xlu0 %v1722, 64
    %v1747 = vpop.permute.xlu0 %1746
    %1752 = vrot.lane.b32.xlu0 %v1740, 64
    %v1753 = vpop.permute.xlu0 %1752
    %1754 = vrot.lane.b32.xlu0 %v1741, 64
    %v1755 = vpop.permute.xlu0 %1754
    %v1758 = vsel %vm702, %v1745, %v1753
    %v1759 = vsel %vm702, %v1747, %v1755
    %v1760 = vadd.f32 %v1758, %v929
    %v1761 = vadd.f32 %v1759, %v930
    %v1762 = vld [vmem:[%s9] sm:$0xff]
    %v1763 = vld [vmem:[%s9 + $0x8] sm:$0xff]
    %v1764 = vld [vmem:[%s9 + $0x10] sm:$0xff]
    %v1765 = vld [vmem:[%s9 + $0x18] sm:$0xff]
    %v1766 = vperm.slane %v61, 0
    %v1768 = vsel %vm69, %v1760, 0
    %v1771 = vsel %vm69, %v1761, 0
    %1773 = vmatpush.msra.mxu0 0.0
    %1774 = vmatpush.msra.mxu0 0.0
    %1775 = vmatpush.msra.mxu0 0.0
    %1776 = vmatpush.msra.mxu0 0.0
    %1777 = vmatpush.msra.mxu0 0.0
    %1778 = vmatpush.msra.mxu0 0.0
    %1779 = vmatpush.msra.mxu0 0.0
    %1780 = vmatpush.msra.mxu0 0.0
    %1781 = vmatpush.msra.mxu0 0.0
    %1782 = vmatpush.msra.mxu0 0.0
    %1783 = vmatpush.msra.mxu0 0.0
    %1784 = vmatpush.msra.mxu0 0.0
    %1785 = vmatpush.msra.mxu0 %v1765
    %1786 = vmatpush.msra.mxu0 %v1764
    %1787 = vmatpush.msra.mxu0 %v1763
    %1788 = vmatpush.msra.mxu0 %v1762
    %1789 = vmatmul.f32.gmra.mxu0 %v1768
    %v1790 = vpop.f32.mrf.mxu0
    %v1791 = vadd.f32 %v1766, %v1790
    %1792 = vmatmul.f32.gmra.mxu0 %v1771
    %v1793 = vpop.f32.mrf.mxu0
    %v1794 = vadd.f32 %v1766, %v1793
    %1795 = vdwg.mxu0
    %v1796 = vld [vmem:[%s12] sm:$0xff]
    %v1797 = vld [vmem:[%s12 + $0x8] sm:$0xff]
    %v1798 = vsub.f32 1.0, %v1796
    %v1799 = vsub.f32 1.0, %v1797
    %v1800 = vmul.f32 %v1798, -1e+32
    %v1801 = vmul.f32 %v1799, -1e+32
    %1803 = vset.pattern.permute.xlu0 0
    %1804 = vperm.xlu0 %1803, %v1800
    %v1805 = vpop.permute.xlu0 %1804
    %1808 = vset.pattern.permute.xlu0 0
    %1809 = vperm.xlu0 %1808, %v1801
    %v1810 = vpop.permute.xlu0 %1809
    %v1812 = vadd.f32 %v1791, %v1805
    %v1813 = vadd.f32 %v1794, %v1810
    %vm1814 = vcmp.lt.s32.totalorder %v966, 8
    %v1815 = vsel %vm1814, %v1812, -3e+38
    %v1816 = vsel %vm1814, %v1813, -3e+38
    %1817 = vmax.xlane.f32.xlu0 %v1815
    %v1818 = vpop.xlane.xlu0 %1817
    %1819 = vmax.xlane.f32.xlu0 %v1816
    %v1820 = vpop.xlane.xlu0 %1819
    %v1821 = vsub.f32 %v1815, %v1818
    %v1822 = vsub.f32 %v1816, %v1820
    %v1823 = vmul.f32 %v1821, 1.442695
    %v1824 = vpow.pop %v1823
    %v1825 = vmul.f32 %v1822, 1.442695
    %v1826 = vpow.pop %v1825
    %1827 = vadd.xlane.f32.xlu0 %v1824
    %v1828 = vpop.xlane.xlu0 %1827
    %1829 = vadd.xlane.f32.xlu0 %v1826
    %v1830 = vpop.xlane.xlu0 %1829
    %v1831 = vrcp.pop %v1828
    %v1832 = vmul.f32 %v1828, %v1831
    %v1833 = vsub.f32 1.0, %v1832
    %v1834 = vmul.f32 %v1831, %v1833
    %v1835 = vadd.f32 %v1831, %v1834
    %vm1836 = vweird.f32 %v1828
    %vm1837 = vweird.f32 %v1831
    %vm1838 = vmor %vm1836, %vm1837
    %v1839 = vsel %vm1838, %v1831, %v1835
    %v1840 = vand.u32 2147483647, %v1828
    %vm1841 = vcmp.eq.f32.partialorder %v1840, 8.507059e+37
    %v1842 = vand.u32 %v1828, 2147483648
    %v1843 = vor.u32 1.1754944e-38, %v1842
    %v1844 = vsel %vm1841, %v1843, %v1839
    %v1845 = vmul.f32 %v1824, %v1844
    %v1846 = vrcp.pop %v1830
    %v1847 = vmul.f32 %v1830, %v1846
    %v1848 = vsub.f32 1.0, %v1847
    %v1849 = vmul.f32 %v1846, %v1848
    %v1850 = vadd.f32 %v1846, %v1849
    %vm1851 = vweird.f32 %v1830
    %vm1852 = vweird.f32 %v1846
    %vm1853 = vmor %vm1851, %vm1852
    %v1854 = vsel %vm1853, %v1846, %v1850
    %v1855 = vand.u32 2147483647, %v1830
    %vm1856 = vcmp.eq.f32.partialorder %v1855, 8.507059e+37
    %v1857 = vand.u32 %v1830, 2147483648
    %v1858 = vor.u32 1.1754944e-38, %v1857
    %v1859 = vsel %vm1856, %v1858, %v1854
    %v1860 = vmul.f32 %v1826, %v1859
    %1861 = vst [vmem:[%s14] sm:$0xff] %v1845
    %1862 = vst [vmem:[%s14 + $0x8] sm:$0xff] %v1860
    %v1863 = vlog2.pop %v1828
    %v1864 = vmul.f32 %v1863, 0.6931472
    %v1865 = vlog2.pop %v1830
    %v1866 = vmul.f32 %v1865, 0.6931472
    %v1867 = vsub.f32 %v1821, %v1864
    %v1868 = vsub.f32 %v1822, %v1866
    %v1869 = vld [vmem:[%s13] sm:$0xff]
    %v1870 = vld [vmem:[%s13 + $0x8] sm:$0xff]
    %1871 = vset.pattern.permute.xlu0 0
    %1872 = vperm.xlu0 %1871, %v1869
    %v1873 = vpop.permute.xlu0 %1872
    %1874 = vset.pattern.permute.xlu0 0
    %1875 = vperm.xlu0 %1874, %v1870
    %v1876 = vpop.permute.xlu0 %1875
    %vm1877 = vcmp.eq.s32.totalorder %v966, %v1873
    %vm1878 = vcmp.eq.s32.totalorder %v966, %v1876
    %v1879 = vsel %vm1877, 1, 0
    %v1880 = vsel %vm1878, 1, 0
    %v1881 = vcvt.s32.f32 %v1879
    %v1882 = vcvt.s32.f32 %v1880
    %v1883 = vmul.f32 %v1881, %v1867
    %v1884 = vmul.f32 %v1882, %v1868
    %1885 = vadd.xlane.f32.xlu0 %v1883
    %v1886 = vpop.xlane.xlu0 %1885
    %1887 = vadd.xlane.f32.xlu0 %v1884
    %v1888 = vpop.xlane.xlu0 %1887
    %v1889 = vsub.f32 0.0, %v1886
    %v1890 = vsub.f32 0.0, %v1888
    %vm1891 = vcmp.ne.s32.totalorder %v1869, 0
    %vm1892 = vcmp.ne.s32.totalorder %v1870, 0
    %v1893 = vsel %vm1891, 1, 0
    %v1894 = vsel %vm1892, 1, 0
    %v1895 = vcvt.s32.f32 %v1893
    %v1896 = vcvt.s32.f32 %v1894
    %v1897 = vmul.f32 %v1889, %v1895
    %v1898 = vmul.f32 %v1890, %v1896
    %vm1899 = vcmask 7168
    %v1900 = vsel %vm1899, %v1897, 0.0
    %v1901 = vsel %vm1899, %v1898, 0.0
    %v1902 = vadd.f32 %v1900, %v1901
    %v1903 = vrot.slane %v1902, 4
    %v1904 = vadd.f32 %v1902, %v1903
    %v1905 = vrot.slane %v1904, 2
    %v1906 = vadd.f32 %v1904, %v1905
    %v1907 = vrot.slane %v1906, 1
    %v1908 = vadd.f32 %v1906, %v1907
    %v1909 = vsel %vm1899, %v1895, 0.0
    %v1910 = vsel %vm1899, %v1896, 0.0
    %v1911 = vadd.f32 %v1909, %v1910
    %v1912 = vrot.slane %v1911, 4
    %v1913 = vadd.f32 %v1911, %v1912
    %v1914 = vrot.slane %v1913, 2
    %v1915 = vadd.f32 %v1913, %v1914
    %v1916 = vrot.slane %v1915, 1
    %v1917 = vadd.f32 %v1915, %v1916
    %v1918 = vmax.f32 %v1917, 1.0
    %v1919 = vrcp.pop %v1918
    %v1920 = vmul.f32 %v1918, %v1919
    %v1921 = vsub.f32 1.0, %v1920
    %v1922 = vmul.f32 %v1919, %v1921
    %v1923 = vadd.f32 %v1919, %v1922
    %vm1924 = vweird.f32 %v1918
    %vm1925 = vweird.f32 %v1919
    %vm1926 = vmor %vm1924, %vm1925
    %v1927 = vsel %vm1926, %v1919, %v1923
    %v1928 = vand.u32 2147483647, %v1918
    %vm1929 = vcmp.eq.f32.partialorder %v1928, 8.507059e+37
    %v1930 = vand.u32 %v1918, 2147483648
    %v1931 = vor.u32 1.1754944e-38, %v1930
    %v1932 = vsel %vm1929, %v1931, %v1927
    %v1933 = vmul.f32 %v1908, %v1932
    %vm1934 = vcmask 0
    %1935 = vst.msk [vmem:[#allocation2] sm:$0x1] %vm1934, %v1933
    // Predicated region
    $region58: #{slu_tagging_forward.1} parent=1 // pred_check
      _
    $region59: #{slu_tagging_forward.1} parent=1 // pred_check_branch
      %1937 = sbr.rel (0) target = $region61
    $region60: #{slu_tagging_forward.1} parent=1 // pred_region
      _
    $region61: #{slu_tagging_forward.1} parent=1 // pred_fallthru
      _
    // Predicated region
    $region62: #{slu_tagging_forward.1} parent=1 // pred_check
      _
    $region63: #{slu_tagging_forward.1} parent=1 // pred_check_branch
      %1939 = sbr.rel (0) target = $region65
    $region64: #{slu_tagging_forward.1} parent=1 // pred_region
      %1941 = vsyncadd [#allocation3], 0
      %s1943 = sshll.u32 [#allocation2], 4
      %s1944 = int_to_ptr.vmem [resolvable:$true] %s1943
      %s1945 = sshll.u32 %s15, 4
      %s1946 = int_to_ptr.hbm [resolvable:$true] %s1945
      %1948 = dma.vmem_to_hbm [thread:$0]  %s1944, 16, %s1946, [#allocation3]
    $region65: #{slu_tagging_forward.1} parent=1 // pred_fallthru
      _
    // Predicated region
    $region66: #{slu_tagging_forward.1} parent=1 // pred_check
      _
    $region67: #{slu_tagging_forward.1} parent=1 // pred_check_branch
      %1950 = sbr.rel (0) target = $region69
    $region68: #{slu_tagging_forward.1} parent=1 // pred_region
      _
    $region69: #{slu_tagging_forward.1} parent=1 // pred_fallthru
      _
    // Predicated region
    $region70: #{slu_tagging_forward.1} parent=1 // pred_check
      _
    $region71: #{slu_tagging_forward.1} parent=1 // pred_check_branch
      %1952 = sbr.rel (0) target = $region73
    $region72: #{slu_tagging_forward.1} parent=1 // pred_region
      %1954 = dma.done [#allocation3], 16
    $region73: #{slu_tagging_forward.1} parent=1 // pred_fallthru
      _
    %1955 = vsyncpa [#allocation3], 1

</llo_original>
